<compile_context>
chip_gen: v7x
topology: tpu7x:2x2x1
jax: 0.10.0
libtpu: 0.0.40
codegen_flags: <defaults>
</compile_context>

<pallas_src>
import jax
import jax.numpy as jnp
from jax.experimental import pallas as pl
from jax.experimental.pallas import tpu as pltpu


def _round_up(x: int, m: int) -> int:
    return (x + m - 1) // m * m


def mlp_kernel(x_ref, w1_ref, b1_ref, w2_ref, b2_ref, o_ref, acc_ref):
    """One (batch-tile, k-tile) grid step of y = relu(x@W1+b1) @ W2 + b2.

    grid = (batch_tiles, k_tiles); K (reduction) axis is last / "arbitrary".
    First matmul accumulates in f32 VMEM scratch across k; bias + ReLU, the
    second matmul and the store happen only on the last k step.
    """
    k = pl.program_id(1)

    @pl.when(k == 0)
    def _init():
        acc_ref[...] = jnp.zeros_like(acc_ref)

    # MXU matmul: bf16 operands, f32 accumulation.
    acc_ref[...] += jnp.dot(
        x_ref[...].astype(jnp.bfloat16), w1_ref[...],
        preferred_element_type=jnp.float32)

    @pl.when(k == pl.num_programs(1) - 1)
    def _finalize():
        h = jnp.maximum(acc_ref[...] + b1_ref[...], 0.0)          # f32 bias + ReLU
        y = jnp.dot(h.astype(jnp.bfloat16), w2_ref[...],
                    preferred_element_type=jnp.float32)
        o_ref[...] = (y + b2_ref[...]).astype(o_ref.dtype)


def prepare_params(w1, b1, w2, b2, *, tk=None):
    """One-time parameter prep (call at init, NOT per forward).

    Casts weights to bf16 and pads: W1's input dim to a multiple of the K tile,
    W2/b2's output dim to a multiple of 128 lanes (unmasked lane-dense stores).
    """
    D_in, H = w1.shape
    H2, D_out = w2.shape
    assert H == H2, "hidden dims of the two Linear layers must match"

    if tk is None:
        # K tile: <=2048 keeps the (tk, 512) bf16 W1 tile at <=2 MiB; multiple
        # of 128 satisfies the lane constraint on x's last block dim.
        tk = min(2048, _round_up(D_in, 128))
    K_pad = _round_up(D_in, tk)
    D_out_pad = _round_up(D_out, 128)

    w1_p = jnp.pad(w1.astype(jnp.bfloat16), ((0, K_pad - D_in), (0, 0)))
    w2_p = jnp.pad(w2.astype(jnp.bfloat16), ((0, 0), (0, D_out_pad - D_out)))
    b1_p = jnp.asarray(b1, jnp.float32).reshape(1, H)
    b2_p = jnp.pad(jnp.asarray(b2, jnp.float32).reshape(1, D_out),
                   ((0, 0), (0, D_out_pad - D_out)))

    meta = dict(D_in=D_in, H=H, D_out=D_out,
                K_pad=K_pad, tk=tk, D_out_pad=D_out_pad)
    return (w1_p, b1_p, w2_p, b2_p), meta


def feature_align_net_apply(params, meta, x, *, tm=None, out_dtype=None,
                            return_padded=False):
    """Forward pass using pre-prepared params; no per-call weight ops."""
    w1_p, b1_p, w2_p, b2_p = params
    B, D_in = x.shape
    assert D_in == meta["D_in"], "input feature dim mismatch with prepared params"
    H, D_out = meta["H"], meta["D_out"]
    K_pad, tk, D_out_pad = meta["K_pad"], meta["tk"], meta["D_out_pad"]

    if out_dtype is None:
        out_dtype = x.dtype

    # Batch tile: one step for small batches (overhead-bound regime), 256/512
    # row tiles for big batches (>=2 grid steps -> both v7x TensorCores work).
    if tm is None:
        if B <= 256:
            tm = B
        elif B <= 2048:
            tm = 256
        else:
            tm = 512
    B_pad = _round_up(B, tm)

    # Per-call x prep only: bf16 cast fused with the row/K zero-pad.
    x_p = x.astype(jnp.bfloat16) if x.dtype != jnp.bfloat16 else x
    if B_pad != B or K_pad != D_in:
        x_p = jnp.pad(x_p, ((0, B_pad - B), (0, K_pad - D_in)))
    # TODO(synk): for very large B not a multiple of tm, a masked trailing
    # block (grid=pl.cdiv) would avoid materializing the padded copy of x.

    grid = (B_pad // tm, K_pad // tk)

    out_itemsize = jnp.dtype(out_dtype).itemsize
    flops = 2 * B_pad * K_pad * H + 2 * B_pad * H * D_out_pad
    bytes_accessed = (B_pad * K_pad * 2 + K_pad * H * 2 + H * 4
                      + H * D_out_pad * 2 + D_out_pad * 4
                      + B_pad * D_out_pad * out_itemsize)
    cost = pl.CostEstimate(flops=flops, transcendentals=0,
                           bytes_accessed=bytes_accessed)

    # VMEM: double-buffered x / W1 tiles + resident W2/b1/b2 + double-buffered
    # out tile + f32 accumulator scratch.  Cap the limit at 48 MiB (safe on
    # v7x's 64 MiB physical VMEM; v5e/v6e have 128 MiB).
    footprint = (2 * tm * tk * 2 + 2 * tk * H * 2
                 + 2 * H * D_out_pad * 2 + 2 * (H + D_out_pad) * 4
                 + 2 * tm * D_out_pad * out_itemsize + tm * H * 4)
    vmem_limit = int(min(48 * 2**20, max(2 * footprint, 16 * 2**20)))

    compiler_params = pltpu.CompilerParams(
        dimension_semantics=("parallel", "arbitrary"),
        vmem_limit_bytes=vmem_limit,
    )

    def build(single_buffer_consts):
        const_kw = ({"pipeline_mode": pl.Buffered(1)}
                    if single_buffer_consts else {})
        return pl.pallas_call(
            mlp_kernel,
            out_shape=jax.ShapeDtypeStruct((B_pad, D_out_pad), out_dtype),
            grid=grid,
            in_specs=[
                pl.BlockSpec((tm, tk), lambda i, k: (i, k)),            # x tile (bf16)
                pl.BlockSpec((tk, H), lambda i, k: (k, 0)),             # W1 K-tile (bf16)
                pl.BlockSpec((1, H), lambda i, k: (0, 0), **const_kw),          # b1 (f32)
                pl.BlockSpec((H, D_out_pad), lambda i, k: (0, 0), **const_kw),  # W2 (bf16)
                pl.BlockSpec((1, D_out_pad), lambda i, k: (0, 0), **const_kw),  # b2 (f32)
            ],
            out_specs=pl.BlockSpec((tm, D_out_pad), lambda i, k: (i, 0)),
            scratch_shapes=[pltpu.VMEM((tm, H), jnp.float32)],
            compiler_params=compiler_params,
            cost_estimate=cost,
        )

    try:
        # Constant-index operands never change block -> a single buffer halves
        # their VMEM footprint (matters most on v7x's 64 MiB VMEM).
        out = build(True)(x_p, w1_p, b1_p, w2_p, b2_p)
    except Exception:
        # pipeline_mode=pl.Buffered(1) not supported by this jax version's
        # pallas_call pipeline; default double-buffering is still correct.
        out = build(False)(x_p, w1_p, b1_p, w2_p, b2_p)

    if return_padded:
        return out
    return out[:B, :D_out]


def feature_align_net(x, w1, b1, w2, b2, **kwargs):
    """One-shot convenience wrapper.  For repeated forwards, call
    prepare_params() once and feature_align_net_apply() per step."""
    params, meta = prepare_params(w1, b1, w2, b2)
    return feature_align_net_apply(params, meta, x, **kwargs)


if __name__ == "__main__":
    # Shapes implied by the module: x = flattened VGG features, hidden = 512
    # (fixed by the module), output_dim = resnet feature dim.  Kept small.
    batch, input_dim, hidden, output_dim = 16, 64, 512, 32

    key = jax.random.PRNGKey(0)
    kx, kw1, kb1, kw2, kb2 = jax.random.split(key, 5)

    x = jax.random.normal(kx, (batch, input_dim), dtype=jnp.float32)

    # Deterministic synthetic parameter init (roughly PyTorch Linear's scale).
    lim1 = 1.0 / jnp.sqrt(input_dim)
    lim2 = 1.0 / jnp.sqrt(hidden)
    w1 = jax.random.uniform(kw1, (input_dim, hidden), jnp.float32, -lim1, lim1)
    b1 = jax.random.uniform(kb1, (hidden,), jnp.float32, -lim1, lim1)
    w2 = jax.random.uniform(kw2, (hidden, output_dim), jnp.float32, -lim2, lim2)
    b2 = jax.random.uniform(kb2, (output_dim,), jnp.float32, -lim2, lim2)

    # One-time parameter prep (bf16 cast + padding), outside the forward path.
    params, meta = prepare_params(w1, b1, w2, b2)
    params = jax.block_until_ready(params)

    out = feature_align_net_apply(params, meta, x)
    out = jax.block_until_ready(out)
    assert out.shape == (batch, output_dim)
    assert out.dtype == x.dtype

    # Reference matching the kernel's numerics (bf16 operands, f32 accumulation).
    ref_h = jnp.maximum(
        jnp.dot(x.astype(jnp.bfloat16), w1.astype(jnp.bfloat16),
                preferred_element_type=jnp.float32) + b1[None, :], 0.0)
    ref = jnp.dot(ref_h.astype(jnp.bfloat16), w2.astype(jnp.bfloat16),
                  preferred_element_type=jnp.float32) + b2[None, :]
    assert jnp.allclose(out, ref, atol=1e-2, rtol=1e-2), "mismatch vs bf16 reference"

    # Loose sanity check vs full-f32 math (bf16 operand quantization only).
    ref_f32 = jnp.maximum(x @ w1 + b1[None, :], 0.0) @ w2 + b2[None, :]
    assert jnp.allclose(out, ref_f32, atol=1e-1, rtol=1e-1), "mismatch vs f32 reference"

    print("KERNEL_OK")
</pallas_src>

<mosaic_0001>
module attributes {stable_mosaic.version = 11 : i64} {
  func.func @mlp_kernel(%arg0: i32, %arg1: i32, %arg2: memref<16x128xbf16, #tpu.memory_space<vmem>>, %arg3: memref<128x512xbf16, #tpu.memory_space<vmem>>, %arg4: memref<1x512xf32, #tpu.memory_space<vmem>>, %arg5: memref<512x128xbf16, #tpu.memory_space<vmem>>, %arg6: memref<1x128xf32, #tpu.memory_space<vmem>>, %arg7: memref<16x128xf32, #tpu.memory_space<vmem>>, %arg8: memref<16x512xf32, #tpu.memory_space<vmem>>) attributes {dimension_semantics = [#tpu.dimension_semantics<parallel>, #tpu.dimension_semantics<arbitrary>], iteration_bounds = array<i64: 1, 1>, scalar_prefetch = 0 : i64, scratch_operands = 1 : i64, tpu.core_type = #tpu.core_type<tc>, window_params = [{transform_indices = @transform_0, window_bounds = array<i64: 16, 128>}, {transform_indices = @transform_1, window_bounds = array<i64: 128, 512>}, {pipeline_mode = #tpu.pipeline_mode<synchronous>, transform_indices = @transform_2, window_bounds = array<i64: 1, 512>}, {pipeline_mode = #tpu.pipeline_mode<synchronous>, transform_indices = @transform_3, window_bounds = array<i64: 512, 128>}, {pipeline_mode = #tpu.pipeline_mode<synchronous>, transform_indices = @transform_4, window_bounds = array<i64: 1, 128>}, {transform_indices = @transform_5, window_bounds = array<i64: 16, 128>}]} {
    %c0_i32 = arith.constant 0 : i32
    %0 = arith.cmpi eq, %arg1, %c0_i32 : i32
    %1 = arith.extui %0 : i1 to i32
    %c0_i32_0 = arith.constant 0 : i32
    %2 = arith.cmpi ne, %1, %c0_i32_0 : i32
    scf.if %2 {
      %cst_10 = arith.constant 0.000000e+00 : f32
      %12 = vector.broadcast %cst_10 : f32 to vector<16x512xf32>
      %c0_11 = arith.constant 0 : index
      %c0_12 = arith.constant 0 : index
      %13 = vector.load %arg8[%c0_11, %c0_12] : memref<16x512xf32, #tpu.memory_space<vmem>>, vector<16x512xf32>
      tpu.vector_store %arg8[%c0_11, %c0_12], %12 {strides = array<i32>} : memref<16x512xf32, #tpu.memory_space<vmem>>, vector<16x512xf32>,
    } else {
    }
    %c0 = arith.constant 0 : index
    %c0_1 = arith.constant 0 : index
    %3 = vector.load %arg8[%c0, %c0_1] : memref<16x512xf32, #tpu.memory_space<vmem>>, vector<16x512xf32>
    %c0_2 = arith.constant 0 : index
    %c0_3 = arith.constant 0 : index
    %4 = vector.load %arg2[%c0_2, %c0_3] : memref<16x128xbf16, #tpu.memory_space<vmem>>, vector<16x128xbf16>
    %c0_4 = arith.constant 0 : index
    %c0_5 = arith.constant 0 : index
    %5 = vector.load %arg3[%c0_4, %c0_5] : memref<128x512xbf16, #tpu.memory_space<vmem>>, vector<128x512xbf16>
    %cst = arith.constant dense<0.000000e+00> : vector<16x512xf32>
    %6 = tpu.matmul %4, %5, %cst {dimension_numbers = #tpu.dot_dimension_numbers<[1], [0], [0], [1], [0, 0, 1, 1], [], []>} : vector<16x128xbf16>, vector<128x512xbf16>, vector<16x512xf32> -> vector<16x512xf32>
    %7 = arith.addf %3, %6 : vector<16x512xf32>
    %c0_6 = arith.constant 0 : index
    %c0_7 = arith.constant 0 : index
    %8 = vector.load %arg8[%c0_6, %c0_7] : memref<16x512xf32, #tpu.memory_space<vmem>>, vector<16x512xf32>
    tpu.vector_store %arg8[%c0_6, %c0_7], %7 {strides = array<i32>} : memref<16x512xf32, #tpu.memory_space<vmem>>, vector<16x512xf32>,
    %c0_i32_8 = arith.constant 0 : i32
    %9 = arith.cmpi eq, %arg1, %c0_i32_8 : i32
    %10 = arith.extui %9 : i1 to i32
    %c0_i32_9 = arith.constant 0 : i32
    %11 = arith.cmpi ne, %10, %c0_i32_9 : i32
    scf.if %11 {
      %c0_10 = arith.constant 0 : index
      %c0_11 = arith.constant 0 : index
      %12 = vector.load %arg8[%c0_10, %c0_11] : memref<16x512xf32, #tpu.memory_space<vmem>>, vector<16x512xf32>
      %c0_12 = arith.constant 0 : index
      %c0_13 = arith.constant 0 : index
      %13 = vector.load %arg4[%c0_12, %c0_13] : memref<1x512xf32, #tpu.memory_space<vmem>>, vector<1x512xf32>
      %14 = vector.broadcast %13 : vector<1x512xf32> to vector<16x512xf32>
      %15 = arith.addf %12, %14 : vector<16x512xf32>
      %cst_14 = arith.constant 0.000000e+00 : f32
      %16 = vector.broadcast %cst_14 : f32 to vector<16x512xf32>
      %17 = arith.maximumf %15, %16 : vector<16x512xf32>
      %18 = arith.truncf %17 : vector<16x512xf32> to vector<16x512xbf16>
      %c0_15 = arith.constant 0 : index
      %c0_16 = arith.constant 0 : index
      %19 = vector.load %arg5[%c0_15, %c0_16] : memref<512x128xbf16, #tpu.memory_space<vmem>>, vector<512x128xbf16>
      %cst_17 = arith.constant dense<0.000000e+00> : vector<16x128xf32>
      %20 = tpu.matmul %18, %19, %cst_17 {dimension_numbers = #tpu.dot_dimension_numbers<[1], [0], [0], [1], [0, 0, 1, 1], [], []>} : vector<16x512xbf16>, vector<512x128xbf16>, vector<16x128xf32> -> vector<16x128xf32>
      %c0_18 = arith.constant 0 : index
      %c0_19 = arith.constant 0 : index
      %21 = vector.load %arg6[%c0_18, %c0_19] : memref<1x128xf32, #tpu.memory_space<vmem>>, vector<1x128xf32>
      %22 = vector.broadcast %21 : vector<1x128xf32> to vector<16x128xf32>
      %23 = arith.addf %20, %22 : vector<16x128xf32>
      %c0_20 = arith.constant 0 : index
      %c0_21 = arith.constant 0 : index
      %24 = vector.load %arg7[%c0_20, %c0_21] : memref<16x128xf32, #tpu.memory_space<vmem>>, vector<16x128xf32>
      tpu.vector_store %arg7[%c0_20, %c0_21], %23 {strides = array<i32>} : memref<16x128xf32, #tpu.memory_space<vmem>>, vector<16x128xf32>,
    } else {
    }
    return
  }
  func.func @transform_0(%arg0: i32, %arg1: i32) -> (i32, i32) {
    %c0_i32 = arith.constant 0 : i32
    return %arg0, %arg1 : i32, i32
  }
  func.func @transform_1(%arg0: i32, %arg1: i32) -> (i32, i32) {
    %c0_i32 = arith.constant 0 : i32
    %c0_i32_0 = arith.constant 0 : i32
    return %arg1, %c0_i32 : i32, i32
  }
  func.func @transform_2(%arg0: i32, %arg1: i32) -> (i32, i32) {
    %c0_i32 = arith.constant 0 : i32
    %c0_i32_0 = arith.constant 0 : i32
    %c0_i32_1 = arith.constant 0 : i32
    return %c0_i32, %c0_i32_0 : i32, i32
  }
  func.func @transform_3(%arg0: i32, %arg1: i32) -> (i32, i32) {
    %c0_i32 = arith.constant 0 : i32
    %c0_i32_0 = arith.constant 0 : i32
    %c0_i32_1 = arith.constant 0 : i32
    return %c0_i32, %c0_i32_0 : i32, i32
  }
  func.func @transform_4(%arg0: i32, %arg1: i32) -> (i32, i32) {
    %c0_i32 = arith.constant 0 : i32
    %c0_i32_0 = arith.constant 0 : i32
    %c0_i32_1 = arith.constant 0 : i32
    return %c0_i32, %c0_i32_0 : i32, i32
  }
  func.func @transform_5(%arg0: i32, %arg1: i32) -> (i32, i32) {
    %c0_i32 = arith.constant 0 : i32
    %c0_i32_0 = arith.constant 0 : i32
    return %arg0, %c0_i32 : i32, i32
  }
}

module attributes {stable_mosaic.version = 11 : i64} {
  func.func @mlp_kernel(%arg0: i32, %arg1: i32, %arg2: memref<16x128xbf16, #tpu.memory_space<vmem>>, %arg3: memref<128x512xbf16, #tpu.memory_space<vmem>>, %arg4: memref<1x512xf32, #tpu.memory_space<vmem>>, %arg5: memref<512x128xbf16, #tpu.memory_space<vmem>>, %arg6: memref<1x128xf32, #tpu.memory_space<vmem>>, %arg7: memref<16x128xf32, #tpu.memory_space<vmem>>, %arg8: memref<16x512xf32, #tpu.memory_space<vmem>>) attributes {dimension_semantics = [#tpu.dimension_semantics<parallel>, #tpu.dimension_semantics<arbitrary>], iteration_bounds = array<i64: 1, 1>, scalar_prefetch = 0 : i64, scratch_operands = 1 : i64, tpu.core_type = #tpu.core_type<tc>, window_params = [{transform_indices = @transform_0, window_bounds = array<i64: 16, 128>}, {transform_indices = @transform_1, window_bounds = array<i64: 128, 512>}, {pipeline_mode = #tpu.pipeline_mode<synchronous>, transform_indices = @transform_2, window_bounds = array<i64: 1, 512>}, {pipeline_mode = #tpu.pipeline_mode<synchronous>, transform_indices = @transform_3, window_bounds = array<i64: 512, 128>}, {pipeline_mode = #tpu.pipeline_mode<synchronous>, transform_indices = @transform_4, window_bounds = array<i64: 1, 128>}, {transform_indices = @transform_5, window_bounds = array<i64: 16, 128>}]} {
    %c0_i32 = arith.constant 0 : i32
    %0 = arith.cmpi eq, %arg1, %c0_i32 : i32
    %1 = arith.extui %0 : i1 to i32
    %c0_i32_0 = arith.constant 0 : i32
    %2 = arith.cmpi ne, %1, %c0_i32_0 : i32
    scf.if %2 {
      %cst_10 = arith.constant 0.000000e+00 : f32
      %12 = vector.broadcast %cst_10 : f32 to vector<16x512xf32>
      %c0_11 = arith.constant 0 : index
      %c0_12 = arith.constant 0 : index
      %13 = vector.load %arg8[%c0_11, %c0_12] : memref<16x512xf32, #tpu.memory_space<vmem>>, vector<16x512xf32>
      tpu.vector_store %arg8[%c0_11, %c0_12], %12 {strides = array<i32>} : memref<16x512xf32, #tpu.memory_space<vmem>>, vector<16x512xf32>,
    } else {
    }
    %c0 = arith.constant 0 : index
    %c0_1 = arith.constant 0 : index
    %3 = vector.load %arg8[%c0, %c0_1] : memref<16x512xf32, #tpu.memory_space<vmem>>, vector<16x512xf32>
    %c0_2 = arith.constant 0 : index
    %c0_3 = arith.constant 0 : index
    %4 = vector.load %arg2[%c0_2, %c0_3] : memref<16x128xbf16, #tpu.memory_space<vmem>>, vector<16x128xbf16>
    %c0_4 = arith.constant 0 : index
    %c0_5 = arith.constant 0 : index
    %5 = vector.load %arg3[%c0_4, %c0_5] : memref<128x512xbf16, #tpu.memory_space<vmem>>, vector<128x512xbf16>
    %cst = arith.constant dense<0.000000e+00> : vector<16x512xf32>
    %6 = tpu.matmul %4, %5, %cst {dimension_numbers = #tpu.dot_dimension_numbers<[1], [0], [0], [1], [0, 0, 1, 1], [], []>} : vector<16x128xbf16>, vector<128x512xbf16>, vector<16x512xf32> -> vector<16x512xf32>
    %7 = arith.addf %3, %6 : vector<16x512xf32>
    %c0_6 = arith.constant 0 : index
    %c0_7 = arith.constant 0 : index
    %8 = vector.load %arg8[%c0_6, %c0_7] : memref<16x512xf32, #tpu.memory_space<vmem>>, vector<16x512xf32>
    tpu.vector_store %arg8[%c0_6, %c0_7], %7 {strides = array<i32>} : memref<16x512xf32, #tpu.memory_space<vmem>>, vector<16x512xf32>,
    %c0_i32_8 = arith.constant 0 : i32
    %9 = arith.cmpi eq, %arg1, %c0_i32_8 : i32
    %10 = arith.extui %9 : i1 to i32
    %c0_i32_9 = arith.constant 0 : i32
    %11 = arith.cmpi ne, %10, %c0_i32_9 : i32
    scf.if %11 {
      %c0_10 = arith.constant 0 : index
      %c0_11 = arith.constant 0 : index
      %12 = vector.load %arg8[%c0_10, %c0_11] : memref<16x512xf32, #tpu.memory_space<vmem>>, vector<16x512xf32>
      %c0_12 = arith.constant 0 : index
      %c0_13 = arith.constant 0 : index
      %13 = vector.load %arg4[%c0_12, %c0_13] : memref<1x512xf32, #tpu.memory_space<vmem>>, vector<1x512xf32>
      %14 = vector.broadcast %13 : vector<1x512xf32> to vector<16x512xf32>
      %15 = arith.addf %12, %14 : vector<16x512xf32>
      %cst_14 = arith.constant 0.000000e+00 : f32
      %16 = vector.broadcast %cst_14 : f32 to vector<16x512xf32>
      %17 = arith.maximumf %15, %16 : vector<16x512xf32>
      %18 = arith.truncf %17 : vector<16x512xf32> to vector<16x512xbf16>
      %c0_15 = arith.constant 0 : index
      %c0_16 = arith.constant 0 : index
      %19 = vector.load %arg5[%c0_15, %c0_16] : memref<512x128xbf16, #tpu.memory_space<vmem>>, vector<512x128xbf16>
      %cst_17 = arith.constant dense<0.000000e+00> : vector<16x128xf32>
      %20 = tpu.matmul %18, %19, %cst_17 {dimension_numbers = #tpu.dot_dimension_numbers<[1], [0], [0], [1], [0, 0, 1, 1], [], []>} : vector<16x512xbf16>, vector<512x128xbf16>, vector<16x128xf32> -> vector<16x128xf32>
      %c0_18 = arith.constant 0 : index
      %c0_19 = arith.constant 0 : index
      %21 = vector.load %arg6[%c0_18, %c0_19] : memref<1x128xf32, #tpu.memory_space<vmem>>, vector<1x128xf32>
      %22 = vector.broadcast %21 : vector<1x128xf32> to vector<16x128xf32>
      %23 = arith.addf %20, %22 : vector<16x128xf32>
      %c0_20 = arith.constant 0 : index
      %c0_21 = arith.constant 0 : index
      %24 = vector.load %arg7[%c0_20, %c0_21] : memref<16x128xf32, #tpu.memory_space<vmem>>, vector<16x128xf32>
      tpu.vector_store %arg7[%c0_20, %c0_21], %23 {strides = array<i32>} : memref<16x128xf32, #tpu.memory_space<vmem>>, vector<16x128xf32>,
    } else {
    }
    return
  }
  func.func @transform_0(%arg0: i32, %arg1: i32) -> (i32, i32) {
    %c0_i32 = arith.constant 0 : i32
    return %arg0, %arg1 : i32, i32
  }
  func.func @transform_1(%arg0: i32, %arg1: i32) -> (i32, i32) {
    %c0_i32 = arith.constant 0 : i32
    %c0_i32_0 = arith.constant 0 : i32
    return %arg1, %c0_i32 : i32, i32
  }
  func.func @transform_2(%arg0: i32, %arg1: i32) -> (i32, i32) {
    %c0_i32 = arith.constant 0 : i32
    %c0_i32_0 = arith.constant 0 : i32
    %c0_i32_1 = arith.constant 0 : i32
    return %c0_i32, %c0_i32_0 : i32, i32
  }
  func.func @transform_3(%arg0: i32, %arg1: i32) -> (i32, i32) {
    %c0_i32 = arith.constant 0 : i32
    %c0_i32_0 = arith.constant 0 : i32
    %c0_i32_1 = arith.constant 0 : i32
    return %c0_i32, %c0_i32_0 : i32, i32
  }
  func.func @transform_4(%arg0: i32, %arg1: i32) -> (i32, i32) {
    %c0_i32 = arith.constant 0 : i32
    %c0_i32_0 = arith.constant 0 : i32
    %c0_i32_1 = arith.constant 0 : i32
    return %c0_i32, %c0_i32_0 : i32, i32
  }
  func.func @transform_5(%arg0: i32, %arg1: i32) -> (i32, i32) {
    %c0_i32 = arith.constant 0 : i32
    %c0_i32_0 = arith.constant 0 : i32
    return %arg0, %c0_i32 : i32, i32
  }
}

</mosaic_0001>

<llo_original>
// kernel: tpu_custom_call.1
$region0: #{tpu_custom_call.1}
  #allocation0 [shape = 'u32[]', space=smem, size = 0x4, offset = 0x4, fixed_abs, tag = 'smem constant byte address 0x4 - core index']
  #allocation1 [shape = 'u32[144,128]{1,0:T(1,128)}', space=vmem, size = 0x12000, scoped, tag = 'internal scratch']
  #allocation2 [shape = 'f32[16,512]{1,0:T(8,128)}', space=vmem, size = 0x8000, scoped, tag = 'scratch operand']
  %s0 = inlined_call_operand.hbm [shape: bf16[16,128], index: 0, kind: input, shape index: {}]
  %s1 = inlined_call_operand.hbm [shape: bf16[128,512], index: 1, kind: input, shape index: {}]
  %s2 = inlined_call_operand.vmem [shape: f32[1,512], index: 2, kind: input, shape index: {}]
  %s3 = inlined_call_operand.hbm [shape: bf16[512,128], index: 3, kind: input, shape index: {}]
  %s4 = inlined_call_operand.vmem [shape: f32[1,128], index: 4, kind: input, shape index: {}]
  %s5 = inlined_call_operand.hbm [shape: f32[16,128], index: 5, kind: output, shape index: {}]
  %s6 = sld [smem:[#allocation0]]
  $region50: #{tpu_custom_call.1} parent=0
    _
  %s8 = ssub.s32 1, %s6
  %s9 = scalar_select 0, %s8, %s6
  $region1: #{tpu_custom_call.1} parent=0
    #allocation3 [shape = 'u8[4096]{0}', space=vmem, size = 0x1000, scoped, tag = 'input window, operand 0, single buffered']
    #allocation4 [shape = 's32[1]{0}', space=sflag, size = 0x4, scoped, tag = 'scoped memory for tpu_custom_call.1']
    #allocation5 [shape = 's32[1]{0}', space=sflag, size = 0x4, scoped, tag = 'scoped memory for tpu_custom_call.1']
    #allocation6 [shape = 'u8[131072]{0}', space=vmem, size = 0x20000, scoped, tag = 'input window, operand 1, single buffered']
    #allocation7 [shape = 's32[1]{0}', space=sflag, size = 0x4, scoped, tag = 'scoped memory for tpu_custom_call.1']
    #allocation8 [shape = 'u8[131072]{0}', space=vmem, size = 0x20000, scoped, tag = 'input window, operand 3, single buffered']
    #allocation9 [shape = 'u8[8192]{0}', space=vmem, size = 0x2000, scoped, tag = 'output window, operand 0, single buffered']
    %10 = vsyncpa [#allocation4], 0
    %11 = vsyncpa [#allocation7], 0
    %12 = vsyncpa [#allocation5], 0
    // Predicated region
    $region2: #{tpu_custom_call.1} parent=1 // pred_check
      _
    $region3: #{tpu_custom_call.1} parent=1 // pred_check_branch
      %14 = sbr.rel (0) target = $region5
    $region4: #{tpu_custom_call.1} parent=1 // pred_region
      %s16 = ssub.s32 128, 128
      %17 = vsyncadd [#allocation4], %s16
      %s18 = sshll.u32 [#allocation3], 4
      %s19 = int_to_ptr.vmem [resolvable:$true] %s18
      %24 = dma.hbm_to_vmem [thread:$0]  %s0, 128, %s19, [#allocation4], 64, 64, 4
    $region5: #{tpu_custom_call.1} parent=1 // pred_fallthru
      _
    // Predicated region
    $region6: #{tpu_custom_call.1} parent=1 // pred_check
      _
    $region7: #{tpu_custom_call.1} parent=1 // pred_check_branch
      %26 = sbr.rel (0) target = $region9
    $region8: #{tpu_custom_call.1} parent=1 // pred_region
      %s28 = ssub.s32 4096, 4096
      %29 = vsyncadd [#allocation7], %s28
      %s30 = sshll.u32 [#allocation6], 4
      %s31 = int_to_ptr.vmem [resolvable:$true] %s30
      %36 = dma.hbm_to_vmem [thread:$0]  %s1, 4096, %s31, [#allocation7], 256, 256, 16
    $region9: #{tpu_custom_call.1} parent=1 // pred_fallthru
      _
    // Predicated region
    $region10: #{tpu_custom_call.1} parent=1 // pred_check
      _
    $region11: #{tpu_custom_call.1} parent=1 // pred_check_branch
      %38 = sbr.rel (0) target = $region13
    $region12: #{tpu_custom_call.1} parent=1 // pred_region
      _
    $region13: #{tpu_custom_call.1} parent=1 // pred_fallthru
      _
    // Predicated region
    $region14: #{tpu_custom_call.1} parent=1 // pred_check
      _
    $region15: #{tpu_custom_call.1} parent=1 // pred_check_branch
      %40 = sbr.rel (0) target = $region17
    $region16: #{tpu_custom_call.1} parent=1 // pred_region
      %s42 = ssub.s32 4096, 4096
      %43 = vsyncadd [#allocation7], %s42
      %s44 = sshll.u32 [#allocation8], 4
      %s45 = int_to_ptr.vmem [resolvable:$true] %s44
      %50 = dma.hbm_to_vmem [thread:$0]  %s3, 4096, %s45, [#allocation7], 64, 64, 4
    $region17: #{tpu_custom_call.1} parent=1 // pred_fallthru
      _
    // Predicated region
    $region18: #{tpu_custom_call.1} parent=1 // pred_check
      _
    $region19: #{tpu_custom_call.1} parent=1 // pred_check_branch
      %52 = sbr.rel (0) target = $region21
    $region20: #{tpu_custom_call.1} parent=1 // pred_region
      _
    $region21: #{tpu_custom_call.1} parent=1 // pred_fallthru
      _
    // Predicated region
    $region22: #{tpu_custom_call.1} parent=1 // pred_check
      _
    $region23: #{tpu_custom_call.1} parent=1 // pred_check_branch
      %54 = sbr.rel (0) target = $region25
    $region24: #{tpu_custom_call.1} parent=1 // pred_region
      %55 = dma.done [#allocation4], 128
    $region25: #{tpu_custom_call.1} parent=1 // pred_fallthru
      _
    // Predicated region
    $region26: #{tpu_custom_call.1} parent=1 // pred_check
      _
    $region27: #{tpu_custom_call.1} parent=1 // pred_check_branch
      %57 = sbr.rel (0) target = $region29
    $region28: #{tpu_custom_call.1} parent=1 // pred_region
      %58 = dma.done [#allocation7], 4096
    $region29: #{tpu_custom_call.1} parent=1 // pred_fallthru
      _
    // Predicated region
    $region30: #{tpu_custom_call.1} parent=1 // pred_check
      _
    $region31: #{tpu_custom_call.1} parent=1 // pred_check_branch
      %60 = sbr.rel (0) target = $region33
    $region32: #{tpu_custom_call.1} parent=1 // pred_region
      %61 = dma.done [#allocation7], 4096
    $region33: #{tpu_custom_call.1} parent=1 // pred_fallthru
      _
    %p63 = scmp.eq.s32.totalorder 0, 0
    // Predicated region
    $region34: #{tpu_custom_call.1} parent=1 // pred_check
      %p64 = pneg %p63
    $region35: #{tpu_custom_call.1} parent=1 // pred_check_branch
      %66 = sbr.rel (%p64) target = $region37
    $region36: #{tpu_custom_call.1} parent=1 // pred_region
      %67 = vst [vmem:[#allocation2] sm:$0xff] 0.0
      %68 = vst [vmem:[#allocation2 + $0x8] sm:$0xff] 0.0
      %69 = vst [vmem:[#allocation2 + $0x10] sm:$0xff] 0.0
      %70 = vst [vmem:[#allocation2 + $0x18] sm:$0xff] 0.0
      %71 = vst [vmem:[#allocation2 + $0x20] sm:$0xff] 0.0
      %72 = vst [vmem:[#allocation2 + $0x28] sm:$0xff] 0.0
      %73 = vst [vmem:[#allocation2 + $0x30] sm:$0xff] 0.0
      %74 = vst [vmem:[#allocation2 + $0x38] sm:$0xff] 0.0
    $region37: #{tpu_custom_call.1} parent=1 // pred_fallthru
      _
    %v75 = vld [vmem:[#allocation2] sm:$0xff]
    %v76 = vld [vmem:[#allocation2 + $0x8] sm:$0xff]
    %v77 = vld [vmem:[#allocation2 + $0x10] sm:$0xff]
    %v78 = vld [vmem:[#allocation2 + $0x18] sm:$0xff]
    %v79 = vld [vmem:[#allocation2 + $0x20] sm:$0xff]
    %v80 = vld [vmem:[#allocation2 + $0x28] sm:$0xff]
    %v81 = vld [vmem:[#allocation2 + $0x30] sm:$0xff]
    %v82 = vld [vmem:[#allocation2 + $0x38] sm:$0xff]
    %v83 = vld [vmem:[#allocation3] sm:$0xf]
    %v84 = vld [vmem:[#allocation3 + $0x4] sm:$0xf]
    %v85 = vld [vmem:[#allocation6] sm:$0xff]
    %v86 = vld [vmem:[#allocation6 + $0x8] sm:$0xff]
    %v87 = vld [vmem:[#allocation6 + $0x10] sm:$0xff]
    %v88 = vld [vmem:[#allocation6 + $0x18] sm:$0xff]
    %v89 = vld [vmem:[#allocation6 + $0x20] sm:$0xff]
    %v90 = vld [vmem:[#allocation6 + $0x28] sm:$0xff]
    %v91 = vld [vmem:[#allocation6 + $0x30] sm:$0xff]
    %v92 = vld [vmem:[#allocation6 + $0x38] sm:$0xff]
    %v93 = vld [vmem:[#allocation6 + $0x40] sm:$0xff]
    %v94 = vld [vmem:[#allocation6 + $0x48] sm:$0xff]
    %v95 = vld [vmem:[#allocation6 + $0x50] sm:$0xff]
    %v96 = vld [vmem:[#allocation6 + $0x58] sm:$0xff]
    %v97 = vld [vmem:[#allocation6 + $0x60] sm:$0xff]
    %v98 = vld [vmem:[#allocation6 + $0x68] sm:$0xff]
    %v99 = vld [vmem:[#allocation6 + $0x70] sm:$0xff]
    %v100 = vld [vmem:[#allocation6 + $0x78] sm:$0xff]
    %v101 = vld [vmem:[#allocation6 + $0x80] sm:$0xff]
    %v102 = vld [vmem:[#allocation6 + $0x88] sm:$0xff]
    %v103 = vld [vmem:[#allocation6 + $0x90] sm:$0xff]
    %v104 = vld [vmem:[#allocation6 + $0x98] sm:$0xff]
    %v105 = vld [vmem:[#allocation6 + $0xa0] sm:$0xff]
    %v106 = vld [vmem:[#allocation6 + $0xa8] sm:$0xff]
    %v107 = vld [vmem:[#allocation6 + $0xb0] sm:$0xff]
    %v108 = vld [vmem:[#allocation6 + $0xb8] sm:$0xff]
    %v109 = vld [vmem:[#allocation6 + $0xc0] sm:$0xff]
    %v110 = vld [vmem:[#allocation6 + $0xc8] sm:$0xff]
    %v111 = vld [vmem:[#allocation6 + $0xd0] sm:$0xff]
    %v112 = vld [vmem:[#allocation6 + $0xd8] sm:$0xff]
    %v113 = vld [vmem:[#allocation6 + $0xe0] sm:$0xff]
    %v114 = vld [vmem:[#allocation6 + $0xe8] sm:$0xff]
    %v115 = vld [vmem:[#allocation6 + $0xf0] sm:$0xff]
    %v116 = vld [vmem:[#allocation6 + $0xf8] sm:$0xff]
    %v119 = vunpack.c.l.b16 %v83
    %v120 = vunpack.c.l.b16 %v84
    %v121 = vpack.c.b16 %v120, %v119
    %v155 = vunpack.c.l.b16 %v85
    %v156 = vunpack.c.h.b16 %v85
    %v157 = vunpack.c.l.b16 %v86
    %v158 = vunpack.c.h.b16 %v86
    %v159 = vunpack.c.l.b16 %v87
    %v160 = vunpack.c.h.b16 %v87
    %v161 = vunpack.c.l.b16 %v88
    %v162 = vunpack.c.h.b16 %v88
    %v163 = vunpack.c.l.b16 %v89
    %v164 = vunpack.c.h.b16 %v89
    %v165 = vunpack.c.l.b16 %v90
    %v166 = vunpack.c.h.b16 %v90
    %v167 = vunpack.c.l.b16 %v91
    %v168 = vunpack.c.h.b16 %v91
    %v169 = vunpack.c.l.b16 %v92
    %v170 = vunpack.c.h.b16 %v92
    %v171 = vunpack.c.l.b16 %v93
    %v172 = vunpack.c.h.b16 %v93
    %v173 = vunpack.c.l.b16 %v94
    %v174 = vunpack.c.h.b16 %v94
    %v175 = vunpack.c.l.b16 %v95
    %v176 = vunpack.c.h.b16 %v95
    %v177 = vunpack.c.l.b16 %v96
    %v178 = vunpack.c.h.b16 %v96
    %v179 = vunpack.c.l.b16 %v97
    %v180 = vunpack.c.h.b16 %v97
    %v181 = vunpack.c.l.b16 %v98
    %v182 = vunpack.c.h.b16 %v98
    %v183 = vunpack.c.l.b16 %v99
    %v184 = vunpack.c.h.b16 %v99
    %v185 = vunpack.c.l.b16 %v100
    %v186 = vunpack.c.h.b16 %v100
    %v187 = vunpack.c.l.b16 %v101
    %v188 = vunpack.c.h.b16 %v101
    %v189 = vunpack.c.l.b16 %v102
    %v190 = vunpack.c.h.b16 %v102
    %v191 = vunpack.c.l.b16 %v103
    %v192 = vunpack.c.h.b16 %v103
    %v193 = vunpack.c.l.b16 %v104
    %v194 = vunpack.c.h.b16 %v104
    %v195 = vunpack.c.l.b16 %v105
    %v196 = vunpack.c.h.b16 %v105
    %v197 = vunpack.c.l.b16 %v106
    %v198 = vunpack.c.h.b16 %v106
    %v199 = vunpack.c.l.b16 %v107
    %v200 = vunpack.c.h.b16 %v107
    %v201 = vunpack.c.l.b16 %v108
    %v202 = vunpack.c.h.b16 %v108
    %v203 = vunpack.c.l.b16 %v109
    %v204 = vunpack.c.h.b16 %v109
    %v205 = vunpack.c.l.b16 %v110
    %v206 = vunpack.c.h.b16 %v110
    %v207 = vunpack.c.l.b16 %v111
    %v208 = vunpack.c.h.b16 %v111
    %v209 = vunpack.c.l.b16 %v112
    %v210 = vunpack.c.h.b16 %v112
    %v211 = vunpack.c.l.b16 %v113
    %v212 = vunpack.c.h.b16 %v113
    %v213 = vunpack.c.l.b16 %v114
    %v214 = vunpack.c.h.b16 %v114
    %v215 = vunpack.c.l.b16 %v115
    %v216 = vunpack.c.h.b16 %v115
    %v217 = vunpack.c.l.b16 %v116
    %v218 = vunpack.c.h.b16 %v116
    %v219 = vpack.c.b16 %v159, %v155
    %v220 = vpack.c.b16 %v160, %v156
    %v221 = vpack.c.b16 %v161, %v157
    %v222 = vpack.c.b16 %v162, %v158
    %v223 = vpack.c.b16 %v167, %v163
    %v224 = vpack.c.b16 %v168, %v164
    %v225 = vpack.c.b16 %v169, %v165
    %v226 = vpack.c.b16 %v170, %v166
    %v227 = vpack.c.b16 %v175, %v171
    %v228 = vpack.c.b16 %v176, %v172
    %v229 = vpack.c.b16 %v177, %v173
    %v230 = vpack.c.b16 %v178, %v174
    %v231 = vpack.c.b16 %v183, %v179
    %v232 = vpack.c.b16 %v184, %v180
    %v233 = vpack.c.b16 %v185, %v181
    %v234 = vpack.c.b16 %v186, %v182
    %v235 = vpack.c.b16 %v191, %v187
    %v236 = vpack.c.b16 %v192, %v188
    %v237 = vpack.c.b16 %v193, %v189
    %v238 = vpack.c.b16 %v194, %v190
    %v239 = vpack.c.b16 %v199, %v195
    %v240 = vpack.c.b16 %v200, %v196
    %v241 = vpack.c.b16 %v201, %v197
    %v242 = vpack.c.b16 %v202, %v198
    %v243 = vpack.c.b16 %v207, %v203
    %v244 = vpack.c.b16 %v208, %v204
    %v245 = vpack.c.b16 %v209, %v205
    %v246 = vpack.c.b16 %v210, %v206
    %v247 = vpack.c.b16 %v215, %v211
    %v248 = vpack.c.b16 %v216, %v212
    %v249 = vpack.c.b16 %v217, %v213
    %v250 = vpack.c.b16 %v218, %v214
    %283 = vmatprep.subr.bf16.mxu0 %v220
    %284 = vmatpush1.bf16.msra.mxu0 %v219
    %285 = vmatprep.subr.bf16.mxu0 %v224
    %286 = vmatpush1.bf16.msra.mxu0 %v223
    %287 = vmatprep.subr.bf16.mxu0 %v228
    %288 = vmatpush1.bf16.msra.mxu0 %v227
    %289 = vmatprep.subr.bf16.mxu0 %v232
    %290 = vmatpush1.bf16.msra.mxu0 %v231
    %291 = vmatprep.subr.bf16.mxu0 %v236
    %292 = vmatpush1.bf16.msra.mxu0 %v235
    %293 = vmatprep.subr.bf16.mxu0 %v240
    %294 = vmatpush1.bf16.msra.mxu0 %v239
    %295 = vmatprep.subr.bf16.mxu0 %v244
    %296 = vmatpush1.bf16.msra.mxu0 %v243
    %297 = vmatprep.subr.bf16.mxu0 %v248
    %298 = vmatpush1.bf16.msra.mxu0 %v247
    %299 = vmatprep.subr.bf16.mxu0 0
    %300 = vmatpush1.bf16.msra.mxu0 0
    %301 = vmatprep.subr.bf16.mxu0 0
    %302 = vmatpush1.bf16.msra.mxu0 0
    %303 = vmatprep.subr.bf16.mxu0 0
    %304 = vmatpush1.bf16.msra.mxu0 0
    %305 = vmatprep.subr.bf16.mxu0 0
    %306 = vmatpush1.bf16.msra.mxu0 0
    %307 = vmatprep.subr.bf16.mxu0 0
    %308 = vmatpush1.bf16.msra.mxu0 0
    %309 = vmatprep.subr.bf16.mxu0 0
    %310 = vmatpush1.bf16.msra.mxu0 0
    %311 = vmatprep.subr.bf16.mxu0 0
    %312 = vmatpush1.bf16.msra.mxu0 0
    %313 = vmatprep.subr.bf16.mxu0 0
    %314 = vmatpush1.bf16.msra.mxu0 0
    %315 = vmatprep.mubr.bf16.mxu0 0
    %316 = vmatmul.mubr.bf16.gmra.mrb[0].mxu0 %v121
    %v317 = vpop.f32.mrb[0].mxu0
    %v318 = vadd.f32 0.0, %v317
    %v319 = vpop.f32.mrb[0].mxu0
    %v320 = vadd.f32 0.0, %v319
    %v321 = vpop.f32.mrb[0].mxu0
    %v322 = vadd.f32 0.0, %v321
    %v323 = vpop.f32.mrb[0].mxu0
    %v324 = vadd.f32 0.0, %v323
    %325 = vdwg.mxu0
    %326 = vmatprep.subr.bf16.mxu0 %v222
    %327 = vmatpush1.bf16.msra.mxu0 %v221
    %328 = vmatprep.subr.bf16.mxu0 %v226
    %329 = vmatpush1.bf16.msra.mxu0 %v225
    %330 = vmatprep.subr.bf16.mxu0 %v230
    %331 = vmatpush1.bf16.msra.mxu0 %v229
    %332 = vmatprep.subr.bf16.mxu0 %v234
    %333 = vmatpush1.bf16.msra.mxu0 %v233
    %334 = vmatprep.subr.bf16.mxu0 %v238
    %335 = vmatpush1.bf16.msra.mxu0 %v237
    %336 = vmatprep.subr.bf16.mxu0 %v242
    %337 = vmatpush1.bf16.msra.mxu0 %v241
    %338 = vmatprep.subr.bf16.mxu0 %v246
    %339 = vmatpush1.bf16.msra.mxu0 %v245
    %340 = vmatprep.subr.bf16.mxu0 %v250
    %341 = vmatpush1.bf16.msra.mxu0 %v249
    %342 = vmatprep.subr.bf16.mxu0 0
    %343 = vmatpush1.bf16.msra.mxu0 0
    %344 = vmatprep.subr.bf16.mxu0 0
    %345 = vmatpush1.bf16.msra.mxu0 0
    %346 = vmatprep.subr.bf16.mxu0 0
    %347 = vmatpush1.bf16.msra.mxu0 0
    %348 = vmatprep.subr.bf16.mxu0 0
    %349 = vmatpush1.bf16.msra.mxu0 0
    %350 = vmatprep.subr.bf16.mxu0 0
    %351 = vmatpush1.bf16.msra.mxu0 0
    %352 = vmatprep.subr.bf16.mxu0 0
    %353 = vmatpush1.bf16.msra.mxu0 0
    %354 = vmatprep.subr.bf16.mxu0 0
    %355 = vmatpush1.bf16.msra.mxu0 0
    %356 = vmatprep.subr.bf16.mxu0 0
    %357 = vmatpush1.bf16.msra.mxu0 0
    %358 = vmatprep.mubr.bf16.mxu0 0
    %359 = vmatmul.mubr.bf16.gmra.mrb[0].mxu0 %v121
    %v360 = vpop.f32.mrb[0].mxu0
    %v361 = vadd.f32 0.0, %v360
    %v362 = vpop.f32.mrb[0].mxu0
    %v363 = vadd.f32 0.0, %v362
    %v364 = vpop.f32.mrb[0].mxu0
    %v365 = vadd.f32 0.0, %v364
    %v366 = vpop.f32.mrb[0].mxu0
    %v367 = vadd.f32 0.0, %v366
    %368 = vdwg.mxu0
    %v369 = vadd.f32 %v75, %v318
    %v370 = vadd.f32 %v76, %v320
    %v371 = vadd.f32 %v77, %v361
    %v372 = vadd.f32 %v78, %v363
    %v373 = vadd.f32 %v79, %v322
    %v374 = vadd.f32 %v80, %v324
    %v375 = vadd.f32 %v81, %v365
    %v376 = vadd.f32 %v82, %v367
    %377 = vst [vmem:[#allocation2] sm:$0xff] %v369
    %378 = vst [vmem:[#allocation2 + $0x8] sm:$0xff] %v370
    %379 = vst [vmem:[#allocation2 + $0x10] sm:$0xff] %v371
    %380 = vst [vmem:[#allocation2 + $0x18] sm:$0xff] %v372
    %381 = vst [vmem:[#allocation2 + $0x20] sm:$0xff] %v373
    %382 = vst [vmem:[#allocation2 + $0x28] sm:$0xff] %v374
    %383 = vst [vmem:[#allocation2 + $0x30] sm:$0xff] %v375
    %384 = vst [vmem:[#allocation2 + $0x38] sm:$0xff] %v376
    // Predicated region
    $region38: #{tpu_custom_call.1} parent=1 // pred_check
      %p385 = pneg %p63
    $region39: #{tpu_custom_call.1} parent=1 // pred_check_branch
      %387 = sbr.rel (%p385) target = $region41
    $region40: #{tpu_custom_call.1} parent=1 // pred_region
      %v388 = vld [vmem:[#allocation2] sm:$0xff]
      %v389 = vld [vmem:[#allocation2 + $0x8] sm:$0xff]
      %v390 = vld [vmem:[#allocation2 + $0x10] sm:$0xff]
      %v391 = vld [vmem:[#allocation2 + $0x18] sm:$0xff]
      %v392 = vld [vmem:[#allocation2 + $0x20] sm:$0xff]
      %v393 = vld [vmem:[#allocation2 + $0x28] sm:$0xff]
      %v394 = vld [vmem:[#allocation2 + $0x30] sm:$0xff]
      %v395 = vld [vmem:[#allocation2 + $0x38] sm:$0xff]
      %v396 = vld [vmem:[%s2] sm:$0xf]
      %v398 = vlaneseq
      %v399 = vshrl.u32 %v398, 7
      %v400 = vsub.s32 0, %v399
      %v401 = vrot.slane %v396, %v400
      %v402 = vlaneseq
      %v403 = vshrl.u32 %v402, 7
      %v404 = vsub.s32 1, %v403
      %v405 = vrot.slane %v396, %v404
      %v406 = vlaneseq
      %v407 = vshrl.u32 %v406, 7
      %v408 = vsub.s32 2, %v407
      %v409 = vrot.slane %v396, %v408
      %v410 = vlaneseq
      %v411 = vshrl.u32 %v410, 7
      %v412 = vsub.s32 3, %v411
      %v413 = vrot.slane %v396, %v412
      %v418 = vadd.f32 %v388, %v401
      %v419 = vadd.f32 %v389, %v405
      %v420 = vadd.f32 %v390, %v409
      %v421 = vadd.f32 %v391, %v413
      %v422 = vadd.f32 %v392, %v401
      %v423 = vadd.f32 %v393, %v405
      %v424 = vadd.f32 %v394, %v409
      %v425 = vadd.f32 %v395, %v413
      %v426 = vmax.f32 %v418, 0.0
      %v427 = vmax.f32 %v419, 0.0
      %v428 = vmax.f32 %v420, 0.0
      %v429 = vmax.f32 %v421, 0.0
      %v430 = vmax.f32 %v422, 0.0
      %v431 = vmax.f32 %v423, 0.0
      %v432 = vmax.f32 %v424, 0.0
      %v433 = vmax.f32 %v425, 0.0
      %v434 = vpack.c.bf16 %v430, %v426
      %v435 = vpack.c.bf16 %v431, %v427
      %v436 = vpack.c.bf16 %v432, %v428
      %v437 = vpack.c.bf16 %v433, %v429
      %v438 = vld [vmem:[#allocation8] sm:$0xf]
      %v439 = vld [vmem:[#allocation8 + $0x4] sm:$0xf]
      %v440 = vld [vmem:[#allocation8 + $0x8] sm:$0xf]
      %v441 = vld [vmem:[#allocation8 + $0xc] sm:$0xf]
      %v442 = vld [vmem:[#allocation8 + $0x10] sm:$0xf]
      %v443 = vld [vmem:[#allocation8 + $0x14] sm:$0xf]
      %v444 = vld [vmem:[#allocation8 + $0x18] sm:$0xf]
      %v445 = vld [vmem:[#allocation8 + $0x1c] sm:$0xf]
      %v446 = vld [vmem:[#allocation8 + $0x20] sm:$0xf]
      %v447 = vld [vmem:[#allocation8 + $0x24] sm:$0xf]
      %v448 = vld [vmem:[#allocation8 + $0x28] sm:$0xf]
      %v449 = vld [vmem:[#allocation8 + $0x2c] sm:$0xf]
      %v450 = vld [vmem:[#allocation8 + $0x30] sm:$0xf]
      %v451 = vld [vmem:[#allocation8 + $0x34] sm:$0xf]
      %v452 = vld [vmem:[#allocation8 + $0x38] sm:$0xf]
      %v453 = vld [vmem:[#allocation8 + $0x3c] sm:$0xf]
      %v454 = vld [vmem:[#allocation8 + $0x40] sm:$0xf]
      %v455 = vld [vmem:[#allocation8 + $0x44] sm:$0xf]
      %v456 = vld [vmem:[#allocation8 + $0x48] sm:$0xf]
      %v457 = vld [vmem:[#allocation8 + $0x4c] sm:$0xf]
      %v458 = vld [vmem:[#allocation8 + $0x50] sm:$0xf]
      %v459 = vld [vmem:[#allocation8 + $0x54] sm:$0xf]
      %v460 = vld [vmem:[#allocation8 + $0x58] sm:$0xf]
      %v461 = vld [vmem:[#allocation8 + $0x5c] sm:$0xf]
      %v462 = vld [vmem:[#allocation8 + $0x60] sm:$0xf]
      %v463 = vld [vmem:[#allocation8 + $0x64] sm:$0xf]
      %v464 = vld [vmem:[#allocation8 + $0x68] sm:$0xf]
      %v465 = vld [vmem:[#allocation8 + $0x6c] sm:$0xf]
      %v466 = vld [vmem:[#allocation8 + $0x70] sm:$0xf]
      %v467 = vld [vmem:[#allocation8 + $0x74] sm:$0xf]
      %v468 = vld [vmem:[#allocation8 + $0x78] sm:$0xf]
      %v469 = vld [vmem:[#allocation8 + $0x7c] sm:$0xf]
      %v470 = vld [vmem:[#allocation8 + $0x80] sm:$0xf]
      %v471 = vld [vmem:[#allocation8 + $0x84] sm:$0xf]
      %v472 = vld [vmem:[#allocation8 + $0x88] sm:$0xf]
      %v473 = vld [vmem:[#allocation8 + $0x8c] sm:$0xf]
      %v474 = vld [vmem:[#allocation8 + $0x90] sm:$0xf]
      %v475 = vld [vmem:[#allocation8 + $0x94] sm:$0xf]
      %v476 = vld [vmem:[#allocation8 + $0x98] sm:$0xf]
      %v477 = vld [vmem:[#allocation8 + $0x9c] sm:$0xf]
      %v478 = vld [vmem:[#allocation8 + $0xa0] sm:$0xf]
      %v479 = vld [vmem:[#allocation8 + $0xa4] sm:$0xf]
      %v480 = vld [vmem:[#allocation8 + $0xa8] sm:$0xf]
      %v481 = vld [vmem:[#allocation8 + $0xac] sm:$0xf]
      %v482 = vld [vmem:[#allocation8 + $0xb0] sm:$0xf]
      %v483 = vld [vmem:[#allocation8 + $0xb4] sm:$0xf]
      %v484 = vld [vmem:[#allocation8 + $0xb8] sm:$0xf]
      %v485 = vld [vmem:[#allocation8 + $0xbc] sm:$0xf]
      %v486 = vld [vmem:[#allocation8 + $0xc0] sm:$0xf]
      %v487 = vld [vmem:[#allocation8 + $0xc4] sm:$0xf]
      %v488 = vld [vmem:[#allocation8 + $0xc8] sm:$0xf]
      %v489 = vld [vmem:[#allocation8 + $0xcc] sm:$0xf]
      %v490 = vld [vmem:[#allocation8 + $0xd0] sm:$0xf]
      %v491 = vld [vmem:[#allocation8 + $0xd4] sm:$0xf]
      %v492 = vld [vmem:[#allocation8 + $0xd8] sm:$0xf]
      %v493 = vld [vmem:[#allocation8 + $0xdc] sm:$0xf]
      %v494 = vld [vmem:[#allocation8 + $0xe0] sm:$0xf]
      %v495 = vld [vmem:[#allocation8 + $0xe4] sm:$0xf]
      %v496 = vld [vmem:[#allocation8 + $0xe8] sm:$0xf]
      %v497 = vld [vmem:[#allocation8 + $0xec] sm:$0xf]
      %v498 = vld [vmem:[#allocation8 + $0xf0] sm:$0xf]
      %v499 = vld [vmem:[#allocation8 + $0xf4] sm:$0xf]
      %v500 = vld [vmem:[#allocation8 + $0xf8] sm:$0xf]
      %v501 = vld [vmem:[#allocation8 + $0xfc] sm:$0xf]
      %v502 = vld [vmem:[%s4] sm:$0x1]
      %v504 = vlaneseq
      %v505 = vshrl.u32 %v504, 7
      %v506 = vsub.s32 0, %v505
      %v507 = vrot.slane %v502, %v506
      %v573 = vunpack.c.l.b16 %v438
      %v574 = vunpack.c.l.b16 %v439
      %v575 = vunpack.c.l.b16 %v440
      %v576 = vunpack.c.l.b16 %v441
      %v577 = vunpack.c.l.b16 %v442
      %v578 = vunpack.c.l.b16 %v443
      %v579 = vunpack.c.l.b16 %v444
      %v580 = vunpack.c.l.b16 %v445
      %v581 = vunpack.c.l.b16 %v446
      %v582 = vunpack.c.l.b16 %v447
      %v583 = vunpack.c.l.b16 %v448
      %v584 = vunpack.c.l.b16 %v449
      %v585 = vunpack.c.l.b16 %v450
      %v586 = vunpack.c.l.b16 %v451
      %v587 = vunpack.c.l.b16 %v452
      %v588 = vunpack.c.l.b16 %v453
      %v589 = vunpack.c.l.b16 %v454
      %v590 = vunpack.c.l.b16 %v455
      %v591 = vunpack.c.l.b16 %v456
      %v592 = vunpack.c.l.b16 %v457
      %v593 = vunpack.c.l.b16 %v458
      %v594 = vunpack.c.l.b16 %v459
      %v595 = vunpack.c.l.b16 %v460
      %v596 = vunpack.c.l.b16 %v461
      %v597 = vunpack.c.l.b16 %v462
      %v598 = vunpack.c.l.b16 %v463
      %v599 = vunpack.c.l.b16 %v464
      %v600 = vunpack.c.l.b16 %v465
      %v601 = vunpack.c.l.b16 %v466
      %v602 = vunpack.c.l.b16 %v467
      %v603 = vunpack.c.l.b16 %v468
      %v604 = vunpack.c.l.b16 %v469
      %v605 = vunpack.c.l.b16 %v470
      %v606 = vunpack.c.l.b16 %v471
      %v607 = vunpack.c.l.b16 %v472
      %v608 = vunpack.c.l.b16 %v473
      %v609 = vunpack.c.l.b16 %v474
      %v610 = vunpack.c.l.b16 %v475
      %v611 = vunpack.c.l.b16 %v476
      %v612 = vunpack.c.l.b16 %v477
      %v613 = vunpack.c.l.b16 %v478
      %v614 = vunpack.c.l.b16 %v479
      %v615 = vunpack.c.l.b16 %v480
      %v616 = vunpack.c.l.b16 %v481
      %v617 = vunpack.c.l.b16 %v482
      %v618 = vunpack.c.l.b16 %v483
      %v619 = vunpack.c.l.b16 %v484
      %v620 = vunpack.c.l.b16 %v485
      %v621 = vunpack.c.l.b16 %v486
      %v622 = vunpack.c.l.b16 %v487
      %v623 = vunpack.c.l.b16 %v488
      %v624 = vunpack.c.l.b16 %v489
      %v625 = vunpack.c.l.b16 %v490
      %v626 = vunpack.c.l.b16 %v491
      %v627 = vunpack.c.l.b16 %v492
      %v628 = vunpack.c.l.b16 %v493
      %v629 = vunpack.c.l.b16 %v494
      %v630 = vunpack.c.l.b16 %v495
      %v631 = vunpack.c.l.b16 %v496
      %v632 = vunpack.c.l.b16 %v497
      %v633 = vunpack.c.l.b16 %v498
      %v634 = vunpack.c.l.b16 %v499
      %v635 = vunpack.c.l.b16 %v500
      %v636 = vunpack.c.l.b16 %v501
      %v637 = vpack.c.b16 %v574, %v573
      %v638 = vpack.c.b16 %v576, %v575
      %v639 = vpack.c.b16 %v578, %v577
      %v640 = vpack.c.b16 %v580, %v579
      %v641 = vpack.c.b16 %v582, %v581
      %v642 = vpack.c.b16 %v584, %v583
      %v643 = vpack.c.b16 %v586, %v585
      %v644 = vpack.c.b16 %v588, %v587
      %v645 = vpack.c.b16 %v590, %v589
      %v646 = vpack.c.b16 %v592, %v591
      %v647 = vpack.c.b16 %v594, %v593
      %v648 = vpack.c.b16 %v596, %v595
      %v649 = vpack.c.b16 %v598, %v597
      %v650 = vpack.c.b16 %v600, %v599
      %v651 = vpack.c.b16 %v602, %v601
      %v652 = vpack.c.b16 %v604, %v603
      %v653 = vpack.c.b16 %v606, %v605
      %v654 = vpack.c.b16 %v608, %v607
      %v655 = vpack.c.b16 %v610, %v609
      %v656 = vpack.c.b16 %v612, %v611
      %v657 = vpack.c.b16 %v614, %v613
      %v658 = vpack.c.b16 %v616, %v615
      %v659 = vpack.c.b16 %v618, %v617
      %v660 = vpack.c.b16 %v620, %v619
      %v661 = vpack.c.b16 %v622, %v621
      %v662 = vpack.c.b16 %v624, %v623
      %v663 = vpack.c.b16 %v626, %v625
      %v664 = vpack.c.b16 %v628, %v627
      %v665 = vpack.c.b16 %v630, %v629
      %v666 = vpack.c.b16 %v632, %v631
      %v667 = vpack.c.b16 %v634, %v633
      %v668 = vpack.c.b16 %v636, %v635
      %701 = vmatprep.subr.bf16.mxu0 0
      %702 = vmatpush1.bf16.msra.mxu0 %v637
      %703 = vmatprep.subr.bf16.mxu0 0
      %704 = vmatpush1.bf16.msra.mxu0 %v638
      %705 = vmatprep.subr.bf16.mxu0 0
      %706 = vmatpush1.bf16.msra.mxu0 %v639
      %707 = vmatprep.subr.bf16.mxu0 0
      %708 = vmatpush1.bf16.msra.mxu0 %v640
      %709 = vmatprep.subr.bf16.mxu0 0
      %710 = vmatpush1.bf16.msra.mxu0 %v641
      %711 = vmatprep.subr.bf16.mxu0 0
      %712 = vmatpush1.bf16.msra.mxu0 %v642
      %713 = vmatprep.subr.bf16.mxu0 0
      %714 = vmatpush1.bf16.msra.mxu0 %v643
      %715 = vmatprep.subr.bf16.mxu0 0
      %716 = vmatpush1.bf16.msra.mxu0 %v644
      %717 = vmatprep.subr.bf16.mxu0 0
      %718 = vmatpush1.bf16.msra.mxu0 %v645
      %719 = vmatprep.subr.bf16.mxu0 0
      %720 = vmatpush1.bf16.msra.mxu0 %v646
      %721 = vmatprep.subr.bf16.mxu0 0
      %722 = vmatpush1.bf16.msra.mxu0 %v647
      %723 = vmatprep.subr.bf16.mxu0 0
      %724 = vmatpush1.bf16.msra.mxu0 %v648
      %725 = vmatprep.subr.bf16.mxu0 0
      %726 = vmatpush1.bf16.msra.mxu0 %v649
      %727 = vmatprep.subr.bf16.mxu0 0
      %728 = vmatpush1.bf16.msra.mxu0 %v650
      %729 = vmatprep.subr.bf16.mxu0 0
      %730 = vmatpush1.bf16.msra.mxu0 %v651
      %731 = vmatprep.subr.bf16.mxu0 0
      %732 = vmatpush1.bf16.msra.mxu0 %v652
      %733 = vmatprep.mubr.bf16.mxu0 %v435
      %734 = vmatmul.mubr.bf16.gmra.mrb[0].mxu0 %v434
      %v735 = vpop.f32.mrb[0].mxu0
      %v736 = vadd.f32 %v507, %v735
      %v737 = vpop.f32.mrb[0].mxu0
      %v738 = vpop.f32.mrb[0].mxu0
      %v739 = vadd.f32 %v507, %v738
      %v740 = vpop.f32.mrb[0].mxu0
      %741 = vdwg.mxu0
      %742 = vmatprep.subr.bf16.mxu0 0
      %743 = vmatpush1.bf16.msra.mxu0 %v653
      %744 = vmatprep.subr.bf16.mxu0 0
      %745 = vmatpush1.bf16.msra.mxu0 %v654
      %746 = vmatprep.subr.bf16.mxu0 0
      %747 = vmatpush1.bf16.msra.mxu0 %v655
      %748 = vmatprep.subr.bf16.mxu0 0
      %749 = vmatpush1.bf16.msra.mxu0 %v656
      %750 = vmatprep.subr.bf16.mxu0 0
      %751 = vmatpush1.bf16.msra.mxu0 %v657
      %752 = vmatprep.subr.bf16.mxu0 0
      %753 = vmatpush1.bf16.msra.mxu0 %v658
      %754 = vmatprep.subr.bf16.mxu0 0
      %755 = vmatpush1.bf16.msra.mxu0 %v659
      %756 = vmatprep.subr.bf16.mxu0 0
      %757 = vmatpush1.bf16.msra.mxu0 %v660
      %758 = vmatprep.subr.bf16.mxu0 0
      %759 = vmatpush1.bf16.msra.mxu0 %v661
      %760 = vmatprep.subr.bf16.mxu0 0
      %761 = vmatpush1.bf16.msra.mxu0 %v662
      %762 = vmatprep.subr.bf16.mxu0 0
      %763 = vmatpush1.bf16.msra.mxu0 %v663
      %764 = vmatprep.subr.bf16.mxu0 0
      %765 = vmatpush1.bf16.msra.mxu0 %v664
      %766 = vmatprep.subr.bf16.mxu0 0
      %767 = vmatpush1.bf16.msra.mxu0 %v665
      %768 = vmatprep.subr.bf16.mxu0 0
      %769 = vmatpush1.bf16.msra.mxu0 %v666
      %770 = vmatprep.subr.bf16.mxu0 0
      %771 = vmatpush1.bf16.msra.mxu0 %v667
      %772 = vmatprep.subr.bf16.mxu0 0
      %773 = vmatpush1.bf16.msra.mxu0 %v668
      %774 = vmatprep.mubr.bf16.mxu0 %v437
      %775 = vmatmul.mubr.bf16.gmra.mrb[0].mxu0 %v436
      %v776 = vpop.f32.mrb[0].mxu0
      %v777 = vadd.f32 %v736, %v776
      %v778 = vpop.f32.mrb[0].mxu0
      %v779 = vpop.f32.mrb[0].mxu0
      %v780 = vadd.f32 %v739, %v779
      %v781 = vpop.f32.mrb[0].mxu0
      %782 = vdwg.mxu0
      %783 = vst [vmem:[#allocation9] sm:$0xff] %v777
      %784 = vst [vmem:[#allocation9 + $0x8] sm:$0xff] %v780
    $region41: #{tpu_custom_call.1} parent=1 // pred_fallthru
      _
    // Predicated region
    $region42: #{tpu_custom_call.1} parent=1 // pred_check
      _
    $region43: #{tpu_custom_call.1} parent=1 // pred_check_branch
      %786 = sbr.rel (0) target = $region45
    $region44: #{tpu_custom_call.1} parent=1 // pred_region
      %s788 = ssub.s32 256, 256
      %789 = vsyncadd [#allocation5], %s788
      %s790 = sshll.u32 [#allocation9], 4
      %s791 = int_to_ptr.vmem [resolvable:$true] %s790
      %796 = dma.vmem_to_hbm [thread:$0]  %s791, 256, %s5, [#allocation5], 128, 128, 8
    $region45: #{tpu_custom_call.1} parent=1 // pred_fallthru
      _
    // Predicated region
    $region46: #{tpu_custom_call.1} parent=1 // pred_check
      _
    $region47: #{tpu_custom_call.1} parent=1 // pred_check_branch
      %798 = sbr.rel (0) target = $region49
    $region48: #{tpu_custom_call.1} parent=1 // pred_region
      %799 = dma.done [#allocation5], 256
    $region49: #{tpu_custom_call.1} parent=1 // pred_fallthru
      _
    %800 = vsyncpa [#allocation4], 1
    %801 = vsyncpa [#allocation7], 1
    %802 = vsyncpa [#allocation5], 1

// kernel: tpu_custom_call.1
$region0: #{tpu_custom_call.1}
  #allocation0 [shape = 'u32[]', space=smem, size = 0x4, offset = 0x4, fixed_abs, tag = 'smem constant byte address 0x4 - core index']
  #allocation1 [shape = 'u32[144,128]{1,0:T(1,128)}', space=vmem, size = 0x12000, scoped, tag = 'internal scratch']
  #allocation2 [shape = 'f32[16,512]{1,0:T(8,128)}', space=vmem, size = 0x8000, scoped, tag = 'scratch operand']
  %s0 = inlined_call_operand.hbm [shape: bf16[16,128], index: 0, kind: input, shape index: {}]
  %s1 = inlined_call_operand.hbm [shape: bf16[128,512], index: 1, kind: input, shape index: {}]
  %s2 = inlined_call_operand.vmem [shape: f32[1,512], index: 2, kind: input, shape index: {}]
  %s3 = inlined_call_operand.hbm [shape: bf16[512,128], index: 3, kind: input, shape index: {}]
  %s4 = inlined_call_operand.vmem [shape: f32[1,128], index: 4, kind: input, shape index: {}]
  %s5 = inlined_call_operand.hbm [shape: f32[16,128], index: 5, kind: output, shape index: {}]
  %s6 = sld [smem:[#allocation0]]
  $region50: #{tpu_custom_call.1} parent=0
    _
  %s8 = ssub.s32 1, %s6
  %s9 = scalar_select 0, %s8, %s6
  $region1: #{tpu_custom_call.1} parent=0
    #allocation3 [shape = 'u8[4096]{0}', space=vmem, size = 0x1000, scoped, tag = 'input window, operand 0, single buffered']
    #allocation4 [shape = 's32[1]{0}', space=sflag, size = 0x4, scoped, tag = 'scoped memory for tpu_custom_call.1']
    #allocation5 [shape = 's32[1]{0}', space=sflag, size = 0x4, scoped, tag = 'scoped memory for tpu_custom_call.1']
    #allocation6 [shape = 'u8[131072]{0}', space=vmem, size = 0x20000, scoped, tag = 'input window, operand 1, single buffered']
    #allocation7 [shape = 's32[1]{0}', space=sflag, size = 0x4, scoped, tag = 'scoped memory for tpu_custom_call.1']
    #allocation8 [shape = 'u8[131072]{0}', space=vmem, size = 0x20000, scoped, tag = 'input window, operand 3, single buffered']
    #allocation9 [shape = 'u8[8192]{0}', space=vmem, size = 0x2000, scoped, tag = 'output window, operand 0, single buffered']
    %10 = vsyncpa [#allocation4], 0
    %11 = vsyncpa [#allocation7], 0
    %12 = vsyncpa [#allocation5], 0
    // Predicated region
    $region2: #{tpu_custom_call.1} parent=1 // pred_check
      _
    $region3: #{tpu_custom_call.1} parent=1 // pred_check_branch
      %14 = sbr.rel (0) target = $region5
    $region4: #{tpu_custom_call.1} parent=1 // pred_region
      %s16 = ssub.s32 128, 128
      %17 = vsyncadd [#allocation4], %s16
      %s18 = sshll.u32 [#allocation3], 4
      %s19 = int_to_ptr.vmem [resolvable:$true] %s18
      %24 = dma.hbm_to_vmem [thread:$0]  %s0, 128, %s19, [#allocation4], 64, 64, 4
    $region5: #{tpu_custom_call.1} parent=1 // pred_fallthru
      _
    // Predicated region
    $region6: #{tpu_custom_call.1} parent=1 // pred_check
      _
    $region7: #{tpu_custom_call.1} parent=1 // pred_check_branch
      %26 = sbr.rel (0) target = $region9
    $region8: #{tpu_custom_call.1} parent=1 // pred_region
      %s28 = ssub.s32 4096, 4096
      %29 = vsyncadd [#allocation7], %s28
      %s30 = sshll.u32 [#allocation6], 4
      %s31 = int_to_ptr.vmem [resolvable:$true] %s30
      %36 = dma.hbm_to_vmem [thread:$0]  %s1, 4096, %s31, [#allocation7], 256, 256, 16
    $region9: #{tpu_custom_call.1} parent=1 // pred_fallthru
      _
    // Predicated region
    $region10: #{tpu_custom_call.1} parent=1 // pred_check
      _
    $region11: #{tpu_custom_call.1} parent=1 // pred_check_branch
      %38 = sbr.rel (0) target = $region13
    $region12: #{tpu_custom_call.1} parent=1 // pred_region
      _
    $region13: #{tpu_custom_call.1} parent=1 // pred_fallthru
      _
    // Predicated region
    $region14: #{tpu_custom_call.1} parent=1 // pred_check
      _
    $region15: #{tpu_custom_call.1} parent=1 // pred_check_branch
      %40 = sbr.rel (0) target = $region17
    $region16: #{tpu_custom_call.1} parent=1 // pred_region
      %s42 = ssub.s32 4096, 4096
      %43 = vsyncadd [#allocation7], %s42
      %s44 = sshll.u32 [#allocation8], 4
      %s45 = int_to_ptr.vmem [resolvable:$true] %s44
      %50 = dma.hbm_to_vmem [thread:$0]  %s3, 4096, %s45, [#allocation7], 64, 64, 4
    $region17: #{tpu_custom_call.1} parent=1 // pred_fallthru
      _
    // Predicated region
    $region18: #{tpu_custom_call.1} parent=1 // pred_check
      _
    $region19: #{tpu_custom_call.1} parent=1 // pred_check_branch
      %52 = sbr.rel (0) target = $region21
    $region20: #{tpu_custom_call.1} parent=1 // pred_region
      _
    $region21: #{tpu_custom_call.1} parent=1 // pred_fallthru
      _
    // Predicated region
    $region22: #{tpu_custom_call.1} parent=1 // pred_check
      _
    $region23: #{tpu_custom_call.1} parent=1 // pred_check_branch
      %54 = sbr.rel (0) target = $region25
    $region24: #{tpu_custom_call.1} parent=1 // pred_region
      %55 = dma.done [#allocation4], 128
    $region25: #{tpu_custom_call.1} parent=1 // pred_fallthru
      _
    // Predicated region
    $region26: #{tpu_custom_call.1} parent=1 // pred_check
      _
    $region27: #{tpu_custom_call.1} parent=1 // pred_check_branch
      %57 = sbr.rel (0) target = $region29
    $region28: #{tpu_custom_call.1} parent=1 // pred_region
      %58 = dma.done [#allocation7], 4096
    $region29: #{tpu_custom_call.1} parent=1 // pred_fallthru
      _
    // Predicated region
    $region30: #{tpu_custom_call.1} parent=1 // pred_check
      _
    $region31: #{tpu_custom_call.1} parent=1 // pred_check_branch
      %60 = sbr.rel (0) target = $region33
    $region32: #{tpu_custom_call.1} parent=1 // pred_region
      %61 = dma.done [#allocation7], 4096
    $region33: #{tpu_custom_call.1} parent=1 // pred_fallthru
      _
    %p63 = scmp.eq.s32.totalorder 0, 0
    // Predicated region
    $region34: #{tpu_custom_call.1} parent=1 // pred_check
      %p64 = pneg %p63
    $region35: #{tpu_custom_call.1} parent=1 // pred_check_branch
      %66 = sbr.rel (%p64) target = $region37
    $region36: #{tpu_custom_call.1} parent=1 // pred_region
      %67 = vst [vmem:[#allocation2] sm:$0xff] 0.0
      %68 = vst [vmem:[#allocation2 + $0x8] sm:$0xff] 0.0
      %69 = vst [vmem:[#allocation2 + $0x10] sm:$0xff] 0.0
      %70 = vst [vmem:[#allocation2 + $0x18] sm:$0xff] 0.0
      %71 = vst [vmem:[#allocation2 + $0x20] sm:$0xff] 0.0
      %72 = vst [vmem:[#allocation2 + $0x28] sm:$0xff] 0.0
      %73 = vst [vmem:[#allocation2 + $0x30] sm:$0xff] 0.0
      %74 = vst [vmem:[#allocation2 + $0x38] sm:$0xff] 0.0
    $region37: #{tpu_custom_call.1} parent=1 // pred_fallthru
      _
    %v75 = vld [vmem:[#allocation2] sm:$0xff]
    %v76 = vld [vmem:[#allocation2 + $0x8] sm:$0xff]
    %v77 = vld [vmem:[#allocation2 + $0x10] sm:$0xff]
    %v78 = vld [vmem:[#allocation2 + $0x18] sm:$0xff]
    %v79 = vld [vmem:[#allocation2 + $0x20] sm:$0xff]
    %v80 = vld [vmem:[#allocation2 + $0x28] sm:$0xff]
    %v81 = vld [vmem:[#allocation2 + $0x30] sm:$0xff]
    %v82 = vld [vmem:[#allocation2 + $0x38] sm:$0xff]
    %v83 = vld [vmem:[#allocation3] sm:$0xf]
    %v84 = vld [vmem:[#allocation3 + $0x4] sm:$0xf]
    %v85 = vld [vmem:[#allocation6] sm:$0xff]
    %v86 = vld [vmem:[#allocation6 + $0x8] sm:$0xff]
    %v87 = vld [vmem:[#allocation6 + $0x10] sm:$0xff]
    %v88 = vld [vmem:[#allocation6 + $0x18] sm:$0xff]
    %v89 = vld [vmem:[#allocation6 + $0x20] sm:$0xff]
    %v90 = vld [vmem:[#allocation6 + $0x28] sm:$0xff]
    %v91 = vld [vmem:[#allocation6 + $0x30] sm:$0xff]
    %v92 = vld [vmem:[#allocation6 + $0x38] sm:$0xff]
    %v93 = vld [vmem:[#allocation6 + $0x40] sm:$0xff]
    %v94 = vld [vmem:[#allocation6 + $0x48] sm:$0xff]
    %v95 = vld [vmem:[#allocation6 + $0x50] sm:$0xff]
    %v96 = vld [vmem:[#allocation6 + $0x58] sm:$0xff]
    %v97 = vld [vmem:[#allocation6 + $0x60] sm:$0xff]
    %v98 = vld [vmem:[#allocation6 + $0x68] sm:$0xff]
    %v99 = vld [vmem:[#allocation6 + $0x70] sm:$0xff]
    %v100 = vld [vmem:[#allocation6 + $0x78] sm:$0xff]
    %v101 = vld [vmem:[#allocation6 + $0x80] sm:$0xff]
    %v102 = vld [vmem:[#allocation6 + $0x88] sm:$0xff]
    %v103 = vld [vmem:[#allocation6 + $0x90] sm:$0xff]
    %v104 = vld [vmem:[#allocation6 + $0x98] sm:$0xff]
    %v105 = vld [vmem:[#allocation6 + $0xa0] sm:$0xff]
    %v106 = vld [vmem:[#allocation6 + $0xa8] sm:$0xff]
    %v107 = vld [vmem:[#allocation6 + $0xb0] sm:$0xff]
    %v108 = vld [vmem:[#allocation6 + $0xb8] sm:$0xff]
    %v109 = vld [vmem:[#allocation6 + $0xc0] sm:$0xff]
    %v110 = vld [vmem:[#allocation6 + $0xc8] sm:$0xff]
    %v111 = vld [vmem:[#allocation6 + $0xd0] sm:$0xff]
    %v112 = vld [vmem:[#allocation6 + $0xd8] sm:$0xff]
    %v113 = vld [vmem:[#allocation6 + $0xe0] sm:$0xff]
    %v114 = vld [vmem:[#allocation6 + $0xe8] sm:$0xff]
    %v115 = vld [vmem:[#allocation6 + $0xf0] sm:$0xff]
    %v116 = vld [vmem:[#allocation6 + $0xf8] sm:$0xff]
    %v119 = vunpack.c.l.b16 %v83
    %v120 = vunpack.c.l.b16 %v84
    %v121 = vpack.c.b16 %v120, %v119
    %v155 = vunpack.c.l.b16 %v85
    %v156 = vunpack.c.h.b16 %v85
    %v157 = vunpack.c.l.b16 %v86
    %v158 = vunpack.c.h.b16 %v86
    %v159 = vunpack.c.l.b16 %v87
    %v160 = vunpack.c.h.b16 %v87
    %v161 = vunpack.c.l.b16 %v88
    %v162 = vunpack.c.h.b16 %v88
    %v163 = vunpack.c.l.b16 %v89
    %v164 = vunpack.c.h.b16 %v89
    %v165 = vunpack.c.l.b16 %v90
    %v166 = vunpack.c.h.b16 %v90
    %v167 = vunpack.c.l.b16 %v91
    %v168 = vunpack.c.h.b16 %v91
    %v169 = vunpack.c.l.b16 %v92
    %v170 = vunpack.c.h.b16 %v92
    %v171 = vunpack.c.l.b16 %v93
    %v172 = vunpack.c.h.b16 %v93
    %v173 = vunpack.c.l.b16 %v94
    %v174 = vunpack.c.h.b16 %v94
    %v175 = vunpack.c.l.b16 %v95
    %v176 = vunpack.c.h.b16 %v95
    %v177 = vunpack.c.l.b16 %v96
    %v178 = vunpack.c.h.b16 %v96
    %v179 = vunpack.c.l.b16 %v97
    %v180 = vunpack.c.h.b16 %v97
    %v181 = vunpack.c.l.b16 %v98
    %v182 = vunpack.c.h.b16 %v98
    %v183 = vunpack.c.l.b16 %v99
    %v184 = vunpack.c.h.b16 %v99
    %v185 = vunpack.c.l.b16 %v100
    %v186 = vunpack.c.h.b16 %v100
    %v187 = vunpack.c.l.b16 %v101
    %v188 = vunpack.c.h.b16 %v101
    %v189 = vunpack.c.l.b16 %v102
    %v190 = vunpack.c.h.b16 %v102
    %v191 = vunpack.c.l.b16 %v103
    %v192 = vunpack.c.h.b16 %v103
    %v193 = vunpack.c.l.b16 %v104
    %v194 = vunpack.c.h.b16 %v104
    %v195 = vunpack.c.l.b16 %v105
    %v196 = vunpack.c.h.b16 %v105
    %v197 = vunpack.c.l.b16 %v106
    %v198 = vunpack.c.h.b16 %v106
    %v199 = vunpack.c.l.b16 %v107
    %v200 = vunpack.c.h.b16 %v107
    %v201 = vunpack.c.l.b16 %v108
    %v202 = vunpack.c.h.b16 %v108
    %v203 = vunpack.c.l.b16 %v109
    %v204 = vunpack.c.h.b16 %v109
    %v205 = vunpack.c.l.b16 %v110
    %v206 = vunpack.c.h.b16 %v110
    %v207 = vunpack.c.l.b16 %v111
    %v208 = vunpack.c.h.b16 %v111
    %v209 = vunpack.c.l.b16 %v112
    %v210 = vunpack.c.h.b16 %v112
    %v211 = vunpack.c.l.b16 %v113
    %v212 = vunpack.c.h.b16 %v113
    %v213 = vunpack.c.l.b16 %v114
    %v214 = vunpack.c.h.b16 %v114
    %v215 = vunpack.c.l.b16 %v115
    %v216 = vunpack.c.h.b16 %v115
    %v217 = vunpack.c.l.b16 %v116
    %v218 = vunpack.c.h.b16 %v116
    %v219 = vpack.c.b16 %v159, %v155
    %v220 = vpack.c.b16 %v160, %v156
    %v221 = vpack.c.b16 %v161, %v157
    %v222 = vpack.c.b16 %v162, %v158
    %v223 = vpack.c.b16 %v167, %v163
    %v224 = vpack.c.b16 %v168, %v164
    %v225 = vpack.c.b16 %v169, %v165
    %v226 = vpack.c.b16 %v170, %v166
    %v227 = vpack.c.b16 %v175, %v171
    %v228 = vpack.c.b16 %v176, %v172
    %v229 = vpack.c.b16 %v177, %v173
    %v230 = vpack.c.b16 %v178, %v174
    %v231 = vpack.c.b16 %v183, %v179
    %v232 = vpack.c.b16 %v184, %v180
    %v233 = vpack.c.b16 %v185, %v181
    %v234 = vpack.c.b16 %v186, %v182
    %v235 = vpack.c.b16 %v191, %v187
    %v236 = vpack.c.b16 %v192, %v188
    %v237 = vpack.c.b16 %v193, %v189
    %v238 = vpack.c.b16 %v194, %v190
    %v239 = vpack.c.b16 %v199, %v195
    %v240 = vpack.c.b16 %v200, %v196
    %v241 = vpack.c.b16 %v201, %v197
    %v242 = vpack.c.b16 %v202, %v198
    %v243 = vpack.c.b16 %v207, %v203
    %v244 = vpack.c.b16 %v208, %v204
    %v245 = vpack.c.b16 %v209, %v205
    %v246 = vpack.c.b16 %v210, %v206
    %v247 = vpack.c.b16 %v215, %v211
    %v248 = vpack.c.b16 %v216, %v212
    %v249 = vpack.c.b16 %v217, %v213
    %v250 = vpack.c.b16 %v218, %v214
    %283 = vmatprep.subr.bf16.mxu0 %v220
    %284 = vmatpush1.bf16.msra.mxu0 %v219
    %285 = vmatprep.subr.bf16.mxu0 %v224
    %286 = vmatpush1.bf16.msra.mxu0 %v223
    %287 = vmatprep.subr.bf16.mxu0 %v228
    %288 = vmatpush1.bf16.msra.mxu0 %v227
    %289 = vmatprep.subr.bf16.mxu0 %v232
    %290 = vmatpush1.bf16.msra.mxu0 %v231
    %291 = vmatprep.subr.bf16.mxu0 %v236
    %292 = vmatpush1.bf16.msra.mxu0 %v235
    %293 = vmatprep.subr.bf16.mxu0 %v240
    %294 = vmatpush1.bf16.msra.mxu0 %v239
    %295 = vmatprep.subr.bf16.mxu0 %v244
    %296 = vmatpush1.bf16.msra.mxu0 %v243
    %297 = vmatprep.subr.bf16.mxu0 %v248
    %298 = vmatpush1.bf16.msra.mxu0 %v247
    %299 = vmatprep.subr.bf16.mxu0 0
    %300 = vmatpush1.bf16.msra.mxu0 0
    %301 = vmatprep.subr.bf16.mxu0 0
    %302 = vmatpush1.bf16.msra.mxu0 0
    %303 = vmatprep.subr.bf16.mxu0 0
    %304 = vmatpush1.bf16.msra.mxu0 0
    %305 = vmatprep.subr.bf16.mxu0 0
    %306 = vmatpush1.bf16.msra.mxu0 0
    %307 = vmatprep.subr.bf16.mxu0 0
    %308 = vmatpush1.bf16.msra.mxu0 0
    %309 = vmatprep.subr.bf16.mxu0 0
    %310 = vmatpush1.bf16.msra.mxu0 0
    %311 = vmatprep.subr.bf16.mxu0 0
    %312 = vmatpush1.bf16.msra.mxu0 0
    %313 = vmatprep.subr.bf16.mxu0 0
    %314 = vmatpush1.bf16.msra.mxu0 0
    %315 = vmatprep.mubr.bf16.mxu0 0
    %316 = vmatmul.mubr.bf16.gmra.mrb[0].mxu0 %v121
    %v317 = vpop.f32.mrb[0].mxu0
    %v318 = vadd.f32 0.0, %v317
    %v319 = vpop.f32.mrb[0].mxu0
    %v320 = vadd.f32 0.0, %v319
    %v321 = vpop.f32.mrb[0].mxu0
    %v322 = vadd.f32 0.0, %v321
    %v323 = vpop.f32.mrb[0].mxu0
    %v324 = vadd.f32 0.0, %v323
    %325 = vdwg.mxu0
    %326 = vmatprep.subr.bf16.mxu0 %v222
    %327 = vmatpush1.bf16.msra.mxu0 %v221
    %328 = vmatprep.subr.bf16.mxu0 %v226
    %329 = vmatpush1.bf16.msra.mxu0 %v225
    %330 = vmatprep.subr.bf16.mxu0 %v230
    %331 = vmatpush1.bf16.msra.mxu0 %v229
    %332 = vmatprep.subr.bf16.mxu0 %v234
    %333 = vmatpush1.bf16.msra.mxu0 %v233
    %334 = vmatprep.subr.bf16.mxu0 %v238
    %335 = vmatpush1.bf16.msra.mxu0 %v237
    %336 = vmatprep.subr.bf16.mxu0 %v242
    %337 = vmatpush1.bf16.msra.mxu0 %v241
    %338 = vmatprep.subr.bf16.mxu0 %v246
    %339 = vmatpush1.bf16.msra.mxu0 %v245
    %340 = vmatprep.subr.bf16.mxu0 %v250
    %341 = vmatpush1.bf16.msra.mxu0 %v249
    %342 = vmatprep.subr.bf16.mxu0 0
    %343 = vmatpush1.bf16.msra.mxu0 0
    %344 = vmatprep.subr.bf16.mxu0 0
    %345 = vmatpush1.bf16.msra.mxu0 0
    %346 = vmatprep.subr.bf16.mxu0 0
    %347 = vmatpush1.bf16.msra.mxu0 0
    %348 = vmatprep.subr.bf16.mxu0 0
    %349 = vmatpush1.bf16.msra.mxu0 0
    %350 = vmatprep.subr.bf16.mxu0 0
    %351 = vmatpush1.bf16.msra.mxu0 0
    %352 = vmatprep.subr.bf16.mxu0 0
    %353 = vmatpush1.bf16.msra.mxu0 0
    %354 = vmatprep.subr.bf16.mxu0 0
    %355 = vmatpush1.bf16.msra.mxu0 0
    %356 = vmatprep.subr.bf16.mxu0 0
    %357 = vmatpush1.bf16.msra.mxu0 0
    %358 = vmatprep.mubr.bf16.mxu0 0
    %359 = vmatmul.mubr.bf16.gmra.mrb[0].mxu0 %v121
    %v360 = vpop.f32.mrb[0].mxu0
    %v361 = vadd.f32 0.0, %v360
    %v362 = vpop.f32.mrb[0].mxu0
    %v363 = vadd.f32 0.0, %v362
    %v364 = vpop.f32.mrb[0].mxu0
    %v365 = vadd.f32 0.0, %v364
    %v366 = vpop.f32.mrb[0].mxu0
    %v367 = vadd.f32 0.0, %v366
    %368 = vdwg.mxu0
    %v369 = vadd.f32 %v75, %v318
    %v370 = vadd.f32 %v76, %v320
    %v371 = vadd.f32 %v77, %v361
    %v372 = vadd.f32 %v78, %v363
    %v373 = vadd.f32 %v79, %v322
    %v374 = vadd.f32 %v80, %v324
    %v375 = vadd.f32 %v81, %v365
    %v376 = vadd.f32 %v82, %v367
    %377 = vst [vmem:[#allocation2] sm:$0xff] %v369
    %378 = vst [vmem:[#allocation2 + $0x8] sm:$0xff] %v370
    %379 = vst [vmem:[#allocation2 + $0x10] sm:$0xff] %v371
    %380 = vst [vmem:[#allocation2 + $0x18] sm:$0xff] %v372
    %381 = vst [vmem:[#allocation2 + $0x20] sm:$0xff] %v373
    %382 = vst [vmem:[#allocation2 + $0x28] sm:$0xff] %v374
    %383 = vst [vmem:[#allocation2 + $0x30] sm:$0xff] %v375
    %384 = vst [vmem:[#allocation2 + $0x38] sm:$0xff] %v376
    // Predicated region
    $region38: #{tpu_custom_call.1} parent=1 // pred_check
      %p385 = pneg %p63
    $region39: #{tpu_custom_call.1} parent=1 // pred_check_branch
      %387 = sbr.rel (%p385) target = $region41
    $region40: #{tpu_custom_call.1} parent=1 // pred_region
      %v388 = vld [vmem:[#allocation2] sm:$0xff]
      %v389 = vld [vmem:[#allocation2 + $0x8] sm:$0xff]
      %v390 = vld [vmem:[#allocation2 + $0x10] sm:$0xff]
      %v391 = vld [vmem:[#allocation2 + $0x18] sm:$0xff]
      %v392 = vld [vmem:[#allocation2 + $0x20] sm:$0xff]
      %v393 = vld [vmem:[#allocation2 + $0x28] sm:$0xff]
      %v394 = vld [vmem:[#allocation2 + $0x30] sm:$0xff]
      %v395 = vld [vmem:[#allocation2 + $0x38] sm:$0xff]
      %v396 = vld [vmem:[%s2] sm:$0xf]
      %v398 = vlaneseq
      %v399 = vshrl.u32 %v398, 7
      %v400 = vsub.s32 0, %v399
      %v401 = vrot.slane %v396, %v400
      %v402 = vlaneseq
      %v403 = vshrl.u32 %v402, 7
      %v404 = vsub.s32 1, %v403
      %v405 = vrot.slane %v396, %v404
      %v406 = vlaneseq
      %v407 = vshrl.u32 %v406, 7
      %v408 = vsub.s32 2, %v407
      %v409 = vrot.slane %v396, %v408
      %v410 = vlaneseq
      %v411 = vshrl.u32 %v410, 7
      %v412 = vsub.s32 3, %v411
      %v413 = vrot.slane %v396, %v412
      %v418 = vadd.f32 %v388, %v401
      %v419 = vadd.f32 %v389, %v405
      %v420 = vadd.f32 %v390, %v409
      %v421 = vadd.f32 %v391, %v413
      %v422 = vadd.f32 %v392, %v401
      %v423 = vadd.f32 %v393, %v405
      %v424 = vadd.f32 %v394, %v409
      %v425 = vadd.f32 %v395, %v413
      %v426 = vmax.f32 %v418, 0.0
      %v427 = vmax.f32 %v419, 0.0
      %v428 = vmax.f32 %v420, 0.0
      %v429 = vmax.f32 %v421, 0.0
      %v430 = vmax.f32 %v422, 0.0
      %v431 = vmax.f32 %v423, 0.0
      %v432 = vmax.f32 %v424, 0.0
      %v433 = vmax.f32 %v425, 0.0
      %v434 = vpack.c.bf16 %v430, %v426
      %v435 = vpack.c.bf16 %v431, %v427
      %v436 = vpack.c.bf16 %v432, %v428
      %v437 = vpack.c.bf16 %v433, %v429
      %v438 = vld [vmem:[#allocation8] sm:$0xf]
      %v439 = vld [vmem:[#allocation8 + $0x4] sm:$0xf]
      %v440 = vld [vmem:[#allocation8 + $0x8] sm:$0xf]
      %v441 = vld [vmem:[#allocation8 + $0xc] sm:$0xf]
      %v442 = vld [vmem:[#allocation8 + $0x10] sm:$0xf]
      %v443 = vld [vmem:[#allocation8 + $0x14] sm:$0xf]
      %v444 = vld [vmem:[#allocation8 + $0x18] sm:$0xf]
      %v445 = vld [vmem:[#allocation8 + $0x1c] sm:$0xf]
      %v446 = vld [vmem:[#allocation8 + $0x20] sm:$0xf]
      %v447 = vld [vmem:[#allocation8 + $0x24] sm:$0xf]
      %v448 = vld [vmem:[#allocation8 + $0x28] sm:$0xf]
      %v449 = vld [vmem:[#allocation8 + $0x2c] sm:$0xf]
      %v450 = vld [vmem:[#allocation8 + $0x30] sm:$0xf]
      %v451 = vld [vmem:[#allocation8 + $0x34] sm:$0xf]
      %v452 = vld [vmem:[#allocation8 + $0x38] sm:$0xf]
      %v453 = vld [vmem:[#allocation8 + $0x3c] sm:$0xf]
      %v454 = vld [vmem:[#allocation8 + $0x40] sm:$0xf]
      %v455 = vld [vmem:[#allocation8 + $0x44] sm:$0xf]
      %v456 = vld [vmem:[#allocation8 + $0x48] sm:$0xf]
      %v457 = vld [vmem:[#allocation8 + $0x4c] sm:$0xf]
      %v458 = vld [vmem:[#allocation8 + $0x50] sm:$0xf]
      %v459 = vld [vmem:[#allocation8 + $0x54] sm:$0xf]
      %v460 = vld [vmem:[#allocation8 + $0x58] sm:$0xf]
      %v461 = vld [vmem:[#allocation8 + $0x5c] sm:$0xf]
      %v462 = vld [vmem:[#allocation8 + $0x60] sm:$0xf]
      %v463 = vld [vmem:[#allocation8 + $0x64] sm:$0xf]
      %v464 = vld [vmem:[#allocation8 + $0x68] sm:$0xf]
      %v465 = vld [vmem:[#allocation8 + $0x6c] sm:$0xf]
      %v466 = vld [vmem:[#allocation8 + $0x70] sm:$0xf]
      %v467 = vld [vmem:[#allocation8 + $0x74] sm:$0xf]
      %v468 = vld [vmem:[#allocation8 + $0x78] sm:$0xf]
      %v469 = vld [vmem:[#allocation8 + $0x7c] sm:$0xf]
      %v470 = vld [vmem:[#allocation8 + $0x80] sm:$0xf]
      %v471 = vld [vmem:[#allocation8 + $0x84] sm:$0xf]
      %v472 = vld [vmem:[#allocation8 + $0x88] sm:$0xf]
      %v473 = vld [vmem:[#allocation8 + $0x8c] sm:$0xf]
      %v474 = vld [vmem:[#allocation8 + $0x90] sm:$0xf]
      %v475 = vld [vmem:[#allocation8 + $0x94] sm:$0xf]
      %v476 = vld [vmem:[#allocation8 + $0x98] sm:$0xf]
      %v477 = vld [vmem:[#allocation8 + $0x9c] sm:$0xf]
      %v478 = vld [vmem:[#allocation8 + $0xa0] sm:$0xf]
      %v479 = vld [vmem:[#allocation8 + $0xa4] sm:$0xf]
      %v480 = vld [vmem:[#allocation8 + $0xa8] sm:$0xf]
      %v481 = vld [vmem:[#allocation8 + $0xac] sm:$0xf]
      %v482 = vld [vmem:[#allocation8 + $0xb0] sm:$0xf]
      %v483 = vld [vmem:[#allocation8 + $0xb4] sm:$0xf]
      %v484 = vld [vmem:[#allocation8 + $0xb8] sm:$0xf]
      %v485 = vld [vmem:[#allocation8 + $0xbc] sm:$0xf]
      %v486 = vld [vmem:[#allocation8 + $0xc0] sm:$0xf]
      %v487 = vld [vmem:[#allocation8 + $0xc4] sm:$0xf]
      %v488 = vld [vmem:[#allocation8 + $0xc8] sm:$0xf]
      %v489 = vld [vmem:[#allocation8 + $0xcc] sm:$0xf]
      %v490 = vld [vmem:[#allocation8 + $0xd0] sm:$0xf]
      %v491 = vld [vmem:[#allocation8 + $0xd4] sm:$0xf]
      %v492 = vld [vmem:[#allocation8 + $0xd8] sm:$0xf]
      %v493 = vld [vmem:[#allocation8 + $0xdc] sm:$0xf]
      %v494 = vld [vmem:[#allocation8 + $0xe0] sm:$0xf]
      %v495 = vld [vmem:[#allocation8 + $0xe4] sm:$0xf]
      %v496 = vld [vmem:[#allocation8 + $0xe8] sm:$0xf]
      %v497 = vld [vmem:[#allocation8 + $0xec] sm:$0xf]
      %v498 = vld [vmem:[#allocation8 + $0xf0] sm:$0xf]
      %v499 = vld [vmem:[#allocation8 + $0xf4] sm:$0xf]
      %v500 = vld [vmem:[#allocation8 + $0xf8] sm:$0xf]
      %v501 = vld [vmem:[#allocation8 + $0xfc] sm:$0xf]
      %v502 = vld [vmem:[%s4] sm:$0x1]
      %v504 = vlaneseq
      %v505 = vshrl.u32 %v504, 7
      %v506 = vsub.s32 0, %v505
      %v507 = vrot.slane %v502, %v506
      %v573 = vunpack.c.l.b16 %v438
      %v574 = vunpack.c.l.b16 %v439
      %v575 = vunpack.c.l.b16 %v440
      %v576 = vunpack.c.l.b16 %v441
      %v577 = vunpack.c.l.b16 %v442
      %v578 = vunpack.c.l.b16 %v443
      %v579 = vunpack.c.l.b16 %v444
      %v580 = vunpack.c.l.b16 %v445
      %v581 = vunpack.c.l.b16 %v446
      %v582 = vunpack.c.l.b16 %v447
      %v583 = vunpack.c.l.b16 %v448
      %v584 = vunpack.c.l.b16 %v449
      %v585 = vunpack.c.l.b16 %v450
      %v586 = vunpack.c.l.b16 %v451
      %v587 = vunpack.c.l.b16 %v452
      %v588 = vunpack.c.l.b16 %v453
      %v589 = vunpack.c.l.b16 %v454
      %v590 = vunpack.c.l.b16 %v455
      %v591 = vunpack.c.l.b16 %v456
      %v592 = vunpack.c.l.b16 %v457
      %v593 = vunpack.c.l.b16 %v458
      %v594 = vunpack.c.l.b16 %v459
      %v595 = vunpack.c.l.b16 %v460
      %v596 = vunpack.c.l.b16 %v461
      %v597 = vunpack.c.l.b16 %v462
      %v598 = vunpack.c.l.b16 %v463
      %v599 = vunpack.c.l.b16 %v464
      %v600 = vunpack.c.l.b16 %v465
      %v601 = vunpack.c.l.b16 %v466
      %v602 = vunpack.c.l.b16 %v467
      %v603 = vunpack.c.l.b16 %v468
      %v604 = vunpack.c.l.b16 %v469
      %v605 = vunpack.c.l.b16 %v470
      %v606 = vunpack.c.l.b16 %v471
      %v607 = vunpack.c.l.b16 %v472
      %v608 = vunpack.c.l.b16 %v473
      %v609 = vunpack.c.l.b16 %v474
      %v610 = vunpack.c.l.b16 %v475
      %v611 = vunpack.c.l.b16 %v476
      %v612 = vunpack.c.l.b16 %v477
      %v613 = vunpack.c.l.b16 %v478
      %v614 = vunpack.c.l.b16 %v479
      %v615 = vunpack.c.l.b16 %v480
      %v616 = vunpack.c.l.b16 %v481
      %v617 = vunpack.c.l.b16 %v482
      %v618 = vunpack.c.l.b16 %v483
      %v619 = vunpack.c.l.b16 %v484
      %v620 = vunpack.c.l.b16 %v485
      %v621 = vunpack.c.l.b16 %v486
      %v622 = vunpack.c.l.b16 %v487
      %v623 = vunpack.c.l.b16 %v488
      %v624 = vunpack.c.l.b16 %v489
      %v625 = vunpack.c.l.b16 %v490
      %v626 = vunpack.c.l.b16 %v491
      %v627 = vunpack.c.l.b16 %v492
      %v628 = vunpack.c.l.b16 %v493
      %v629 = vunpack.c.l.b16 %v494
      %v630 = vunpack.c.l.b16 %v495
      %v631 = vunpack.c.l.b16 %v496
      %v632 = vunpack.c.l.b16 %v497
      %v633 = vunpack.c.l.b16 %v498
      %v634 = vunpack.c.l.b16 %v499
      %v635 = vunpack.c.l.b16 %v500
      %v636 = vunpack.c.l.b16 %v501
      %v637 = vpack.c.b16 %v574, %v573
      %v638 = vpack.c.b16 %v576, %v575
      %v639 = vpack.c.b16 %v578, %v577
      %v640 = vpack.c.b16 %v580, %v579
      %v641 = vpack.c.b16 %v582, %v581
      %v642 = vpack.c.b16 %v584, %v583
      %v643 = vpack.c.b16 %v586, %v585
      %v644 = vpack.c.b16 %v588, %v587
      %v645 = vpack.c.b16 %v590, %v589
      %v646 = vpack.c.b16 %v592, %v591
      %v647 = vpack.c.b16 %v594, %v593
      %v648 = vpack.c.b16 %v596, %v595
      %v649 = vpack.c.b16 %v598, %v597
      %v650 = vpack.c.b16 %v600, %v599
      %v651 = vpack.c.b16 %v602, %v601
      %v652 = vpack.c.b16 %v604, %v603
      %v653 = vpack.c.b16 %v606, %v605
      %v654 = vpack.c.b16 %v608, %v607
      %v655 = vpack.c.b16 %v610, %v609
      %v656 = vpack.c.b16 %v612, %v611
      %v657 = vpack.c.b16 %v614, %v613
      %v658 = vpack.c.b16 %v616, %v615
      %v659 = vpack.c.b16 %v618, %v617
      %v660 = vpack.c.b16 %v620, %v619
      %v661 = vpack.c.b16 %v622, %v621
      %v662 = vpack.c.b16 %v624, %v623
      %v663 = vpack.c.b16 %v626, %v625
      %v664 = vpack.c.b16 %v628, %v627
      %v665 = vpack.c.b16 %v630, %v629
      %v666 = vpack.c.b16 %v632, %v631
      %v667 = vpack.c.b16 %v634, %v633
      %v668 = vpack.c.b16 %v636, %v635
      %701 = vmatprep.subr.bf16.mxu0 0
      %702 = vmatpush1.bf16.msra.mxu0 %v637
      %703 = vmatprep.subr.bf16.mxu0 0
      %704 = vmatpush1.bf16.msra.mxu0 %v638
      %705 = vmatprep.subr.bf16.mxu0 0
      %706 = vmatpush1.bf16.msra.mxu0 %v639
      %707 = vmatprep.subr.bf16.mxu0 0
      %708 = vmatpush1.bf16.msra.mxu0 %v640
      %709 = vmatprep.subr.bf16.mxu0 0
      %710 = vmatpush1.bf16.msra.mxu0 %v641
      %711 = vmatprep.subr.bf16.mxu0 0
      %712 = vmatpush1.bf16.msra.mxu0 %v642
      %713 = vmatprep.subr.bf16.mxu0 0
      %714 = vmatpush1.bf16.msra.mxu0 %v643
      %715 = vmatprep.subr.bf16.mxu0 0
      %716 = vmatpush1.bf16.msra.mxu0 %v644
      %717 = vmatprep.subr.bf16.mxu0 0
      %718 = vmatpush1.bf16.msra.mxu0 %v645
      %719 = vmatprep.subr.bf16.mxu0 0
      %720 = vmatpush1.bf16.msra.mxu0 %v646
      %721 = vmatprep.subr.bf16.mxu0 0
      %722 = vmatpush1.bf16.msra.mxu0 %v647
      %723 = vmatprep.subr.bf16.mxu0 0
      %724 = vmatpush1.bf16.msra.mxu0 %v648
      %725 = vmatprep.subr.bf16.mxu0 0
      %726 = vmatpush1.bf16.msra.mxu0 %v649
      %727 = vmatprep.subr.bf16.mxu0 0
      %728 = vmatpush1.bf16.msra.mxu0 %v650
      %729 = vmatprep.subr.bf16.mxu0 0
      %730 = vmatpush1.bf16.msra.mxu0 %v651
      %731 = vmatprep.subr.bf16.mxu0 0
      %732 = vmatpush1.bf16.msra.mxu0 %v652
      %733 = vmatprep.mubr.bf16.mxu0 %v435
      %734 = vmatmul.mubr.bf16.gmra.mrb[0].mxu0 %v434
      %v735 = vpop.f32.mrb[0].mxu0
      %v736 = vadd.f32 %v507, %v735
      %v737 = vpop.f32.mrb[0].mxu0
      %v738 = vpop.f32.mrb[0].mxu0
      %v739 = vadd.f32 %v507, %v738
      %v740 = vpop.f32.mrb[0].mxu0
      %741 = vdwg.mxu0
      %742 = vmatprep.subr.bf16.mxu0 0
      %743 = vmatpush1.bf16.msra.mxu0 %v653
      %744 = vmatprep.subr.bf16.mxu0 0
      %745 = vmatpush1.bf16.msra.mxu0 %v654
      %746 = vmatprep.subr.bf16.mxu0 0
      %747 = vmatpush1.bf16.msra.mxu0 %v655
      %748 = vmatprep.subr.bf16.mxu0 0
      %749 = vmatpush1.bf16.msra.mxu0 %v656
      %750 = vmatprep.subr.bf16.mxu0 0
      %751 = vmatpush1.bf16.msra.mxu0 %v657
      %752 = vmatprep.subr.bf16.mxu0 0
      %753 = vmatpush1.bf16.msra.mxu0 %v658
      %754 = vmatprep.subr.bf16.mxu0 0
      %755 = vmatpush1.bf16.msra.mxu0 %v659
      %756 = vmatprep.subr.bf16.mxu0 0
      %757 = vmatpush1.bf16.msra.mxu0 %v660
      %758 = vmatprep.subr.bf16.mxu0 0
      %759 = vmatpush1.bf16.msra.mxu0 %v661
      %760 = vmatprep.subr.bf16.mxu0 0
      %761 = vmatpush1.bf16.msra.mxu0 %v662
      %762 = vmatprep.subr.bf16.mxu0 0
      %763 = vmatpush1.bf16.msra.mxu0 %v663
      %764 = vmatprep.subr.bf16.mxu0 0
      %765 = vmatpush1.bf16.msra.mxu0 %v664
      %766 = vmatprep.subr.bf16.mxu0 0
      %767 = vmatpush1.bf16.msra.mxu0 %v665
      %768 = vmatprep.subr.bf16.mxu0 0
      %769 = vmatpush1.bf16.msra.mxu0 %v666
      %770 = vmatprep.subr.bf16.mxu0 0
      %771 = vmatpush1.bf16.msra.mxu0 %v667
      %772 = vmatprep.subr.bf16.mxu0 0
      %773 = vmatpush1.bf16.msra.mxu0 %v668
      %774 = vmatprep.mubr.bf16.mxu0 %v437
      %775 = vmatmul.mubr.bf16.gmra.mrb[0].mxu0 %v436
      %v776 = vpop.f32.mrb[0].mxu0
      %v777 = vadd.f32 %v736, %v776
      %v778 = vpop.f32.mrb[0].mxu0
      %v779 = vpop.f32.mrb[0].mxu0
      %v780 = vadd.f32 %v739, %v779
      %v781 = vpop.f32.mrb[0].mxu0
      %782 = vdwg.mxu0
      %783 = vst [vmem:[#allocation9] sm:$0xff] %v777
      %784 = vst [vmem:[#allocation9 + $0x8] sm:$0xff] %v780
    $region41: #{tpu_custom_call.1} parent=1 // pred_fallthru
      _
    // Predicated region
    $region42: #{tpu_custom_call.1} parent=1 // pred_check
      _
    $region43: #{tpu_custom_call.1} parent=1 // pred_check_branch
      %786 = sbr.rel (0) target = $region45
    $region44: #{tpu_custom_call.1} parent=1 // pred_region
      %s788 = ssub.s32 256, 256
      %789 = vsyncadd [#allocation5], %s788
      %s790 = sshll.u32 [#allocation9], 4
      %s791 = int_to_ptr.vmem [resolvable:$true] %s790
      %796 = dma.vmem_to_hbm [thread:$0]  %s791, 256, %s5, [#allocation5], 128, 128, 8
    $region45: #{tpu_custom_call.1} parent=1 // pred_fallthru
      _
    // Predicated region
    $region46: #{tpu_custom_call.1} parent=1 // pred_check
      _
    $region47: #{tpu_custom_call.1} parent=1 // pred_check_branch
      %798 = sbr.rel (0) target = $region49
    $region48: #{tpu_custom_call.1} parent=1 // pred_region
      %799 = dma.done [#allocation5], 256
    $region49: #{tpu_custom_call.1} parent=1 // pred_fallthru
      _
    %800 = vsyncpa [#allocation4], 1
    %801 = vsyncpa [#allocation7], 1
    %802 = vsyncpa [#allocation5], 1

</llo_original>
